<compile_context>
chip_gen: v7x
topology: tpu7x:2x2x1
jax: 0.10.0
libtpu: 0.0.40
codegen_flags: <defaults>
</compile_context>

<pallas_src>
import math

import jax
import jax.numpy as jnp
from jax.experimental import pallas as pl
from jax.experimental.pallas import tpu as pltpu


LANE = 128
SUBLANE = 8


def _round_up(x, m):
    return ((x + m - 1) // m) * m


# ------------------------------------------------------------------
# Fused kernel factory
# ------------------------------------------------------------------
def make_discriminator_kernel(num_layers, T, B_pad, H, mxu_dtype):
    """Fused num_layers-LSTM + FC + sigmoid kernel.

    Ref layout (full arrays in VMEM):
      refs[0]               x_ref   : (T*B_pad, D_in)  time-major, mxu_dtype
      refs[1 + 3l + 0]      wih[l]  : (D_prev, GP)     input->gates, packed, mxu_dtype
      refs[1 + 3l + 1]      whh[l]  : (H, GP)          hidden->gates, packed, mxu_dtype
      refs[1 + 3l + 2]      b[l]    : (1, GP)          b_ih + b_hh, f32
      refs[1 + 3L + 0]      fcw     : (H, 128)         fc weight in column 0, mxu_dtype
      refs[1 + 3L + 1]      fcb     : (1, 128)         fc bias in lane 0, f32
      refs[1 + 3L + 2]      out_ref : (B_pad, 128)     sigmoid(fc(h_T)), result in lane 0
      refs[1 + 3L + 3]      seq_scr : (T*B_pad, H)     inter-layer hidden sequence (scratch)
    """

    def kernel(*refs):
        x_ref = refs[0]
        layer_refs = refs[1:1 + 3 * num_layers]
        fcw_ref = refs[1 + 3 * num_layers]
        fcb_ref = refs[2 + 3 * num_layers]
        out_ref = refs[3 + 3 * num_layers]
        seq_scr = refs[4 + 3 * num_layers]

        h_last = None
        for l in range(num_layers):
            wih = layer_refs[3 * l + 0][...]              # (D_prev, GP)
            whh = layer_refs[3 * l + 1][...]              # (H, GP)
            b = layer_refs[3 * l + 2][...]                # (1, GP) f32

            # Hoisted input projection + bias: one MXU call for the whole
            # sequence (off the serial h->h critical path).
            if l == 0:
                seq = x_ref[...]                          # already mxu_dtype
            else:
                seq = seq_scr[...].astype(mxu_dtype)      # (T*B_pad, H)
            gx = jnp.dot(seq, wih,
                         preferred_element_type=jnp.float32) + b   # (T*B_pad, GP) f32

            h = jnp.zeros((B_pad, H), jnp.float32)
            c = jnp.zeros((B_pad, H), jnp.float32)

            # Fully unrolled recurrence (T is small and static); h/c live in vregs.
            for t in range(T):
                hb = h.astype(mxu_dtype)
                # (8, GP) sublane-aligned gx slice + single (B_pad, 128) MXU tile.
                gates = gx[t * B_pad:(t + 1) * B_pad, :] + jnp.dot(
                    hb, whh, preferred_element_type=jnp.float32)
                # One whole-vreg sigmoid + one whole-vreg tanh cover all 4 gates.
                sig = jax.nn.sigmoid(gates)
                th = jnp.tanh(gates)
                i_g = sig[:, 0 * H:1 * H]
                f_g = sig[:, 1 * H:2 * H]
                g_g = th[:, 2 * H:3 * H]
                o_g = sig[:, 3 * H:4 * H]
                c = f_g * c + i_g * g_g
                h = o_g * jnp.tanh(c)
                if l + 1 < num_layers:
                    # Sublane-aligned spill for the next layer's hoisted
                    # projection (off the recurrence's data-dependence chain).
                    seq_scr[t * B_pad:(t + 1) * B_pad, :] = h
            h_last = h

        # FC + sigmoid epilogue; lane-dense (B_pad, 128) store (value in lane 0).
        z = jnp.dot(h_last.astype(mxu_dtype), fcw_ref[...],
                    preferred_element_type=jnp.float32) + fcb_ref[...]
        out_ref[...] = jax.nn.sigmoid(z)

    return kernel


# ------------------------------------------------------------------
# Parameter setup (PyTorch-style raw params + one-time kernel-ready transform)
# ------------------------------------------------------------------
def init_discriminator_params(key, input_size, hidden_size, num_layers):
    """PyTorch-style init: uniform(-1/sqrt(H), 1/sqrt(H)) for all LSTM/FC params."""
    k = 1.0 / math.sqrt(hidden_size)
    params = {"lstm": []}
    for layer in range(num_layers):
        d_in = input_size if layer == 0 else hidden_size
        key, k1, k2, k3, k4 = jax.random.split(key, 5)
        w_ih = jax.random.uniform(k1, (4 * hidden_size, d_in), jnp.float32, -k, k)
        w_hh = jax.random.uniform(k2, (4 * hidden_size, hidden_size), jnp.float32, -k, k)
        b_ih = jax.random.uniform(k3, (4 * hidden_size,), jnp.float32, -k, k)
        b_hh = jax.random.uniform(k4, (4 * hidden_size,), jnp.float32, -k, k)
        params["lstm"].append((w_ih, w_hh, b_ih, b_hh))
    key, k1, k2 = jax.random.split(key, 3)
    params["fc_w"] = jax.random.uniform(k1, (1, hidden_size), jnp.float32, -k, k)
    params["fc_b"] = jax.random.uniform(k2, (1,), jnp.float32, -k, k)
    return params


def prepare_kernel_params(params, hidden_size, mxu_dtype=jnp.bfloat16):
    """One-time transform: transpose weights, combine biases, pack the 4 gates
    contiguously into a single lane block of width GP = round_up(4H, 128), and
    cast MXU operands to bf16 (biases stay f32)."""
    H = hidden_size
    GP = _round_up(4 * H, LANE)                 # 128 for H = 32
    num_layers = len(params["lstm"])

    def pack(w_t):
        # w_t: (d_in, 4H) in PyTorch gate order (i, f, g, o) -> (d_in, GP),
        # gates contiguous in lanes [0, 4H); padding lanes (if any) are zero.
        d_in = w_t.shape[0]
        out = jnp.zeros((d_in, GP), jnp.float32)
        out = out.at[:, :4 * H].set(w_t)
        return out.astype(mxu_dtype)

    kp = {"H": H, "GP": GP, "num_layers": num_layers,
          "mxu_dtype": mxu_dtype, "lstm": []}
    for layer, (w_ih, w_hh, b_ih, b_hh) in enumerate(params["lstm"]):
        wih_p = pack(w_ih.T)                                  # (D_prev, GP)
        whh_p = pack(w_hh.T)                                  # (H, GP)
        b_p = jnp.zeros((1, GP), jnp.float32).at[0, :4 * H].set(b_ih + b_hh)
        kp["lstm"].append((wih_p, whh_p, b_p))

    fcw_p = jnp.zeros((H, LANE), jnp.float32).at[:, 0].set(
        params["fc_w"][0]).astype(mxu_dtype)                  # (H, 128), col 0 real
    fcb_p = jnp.zeros((1, LANE), jnp.float32).at[0, 0].set(params["fc_b"][0])
    kp["fc_w"] = fcw_p
    kp["fc_b"] = fcb_p
    return kp


# ------------------------------------------------------------------
# Forward (single fused pallas_call)
# ------------------------------------------------------------------
def discriminator_forward(kparams, x, batch_first=True):
    """x: (B, T, input_size) if batch_first else (T, B, input_size). Returns (B, 1)."""
    x = x.astype(jnp.float32)
    x_tm = jnp.transpose(x, (1, 0, 2)) if batch_first else x    # (T, B, D)
    T, B, D = x_tm.shape

    # Pad batch to a sublane multiple so all per-step slices / stores are
    # (8, lanes)-aligned; padded rows are zeros and are dropped at the end.
    B_pad = _round_up(max(B, SUBLANE), SUBLANE)
    if B_pad != B:
        x_tm = jnp.pad(x_tm, ((0, 0), (0, B_pad - B), (0, 0)))

    H = kparams["H"]
    GP = kparams["GP"]
    num_layers = kparams["num_layers"]
    mxu_dtype = kparams["mxu_dtype"]

    x_flat = x_tm.reshape(T * B_pad, D).astype(mxu_dtype)       # time-major rows

    kernel = make_discriminator_kernel(num_layers, T, B_pad, H, mxu_dtype)

    flat_weights = []
    for (wih_p, whh_p, b_p) in kparams["lstm"]:
        flat_weights += [wih_p, whh_p, b_p]

    vmem = pl.BlockSpec(memory_space=pltpu.MemorySpace.VMEM)
    n_in = 1 + len(flat_weights) + 2

    # Advisory cost estimate (this call is latency-bound on the recurrence).
    flops = 0
    for (wih_p, whh_p, _) in kparams["lstm"]:
        d_prev = wih_p.shape[0]
        flops += 2 * T * B_pad * d_prev * GP        # hoisted input projection
        flops += 2 * T * B_pad * H * GP             # per-step h @ W_hh
    flops += 2 * B_pad * H * LANE                   # fc
    transcendentals = num_layers * T * B_pad * (2 * GP + H) + B_pad * LANE
    bytes_accessed = (
        x_flat.size * x_flat.dtype.itemsize
        + sum(w.size * w.dtype.itemsize for w in flat_weights)
        + kparams["fc_w"].size * kparams["fc_w"].dtype.itemsize
        + kparams["fc_b"].size * kparams["fc_b"].dtype.itemsize
        + B_pad * LANE * 4)

    out_pad = pl.pallas_call(
        kernel,
        out_shape=jax.ShapeDtypeStruct((B_pad, LANE), jnp.float32),
        in_specs=[vmem] * n_in,
        out_specs=vmem,
        scratch_shapes=[pltpu.VMEM((T * B_pad, H), jnp.float32)],
        cost_estimate=pl.CostEstimate(
            flops=int(flops),
            transcendentals=int(transcendentals),
            bytes_accessed=int(bytes_accessed)),
    )(x_flat, *flat_weights, kparams["fc_w"], kparams["fc_b"])

    return out_pad[:B, :1]                                       # (B, 1)


# ------------------------------------------------------------------
# Pure-JAX reference (f32 everywhere, no Pallas) for a sanity check
# ------------------------------------------------------------------
def discriminator_forward_ref(params, x, batch_first=True):
    x = x.astype(jnp.float32)
    h_seq = jnp.transpose(x, (1, 0, 2)) if batch_first else x
    for (w_ih, w_hh, b_ih, b_hh) in params["lstm"]:
        T, B, _ = h_seq.shape
        H = w_hh.shape[1]
        h = jnp.zeros((B, H), jnp.float32)
        c = jnp.zeros((B, H), jnp.float32)
        outs = []
        for t in range(T):
            gates = h_seq[t] @ w_ih.T + h @ w_hh.T + b_ih + b_hh
            i_g = jax.nn.sigmoid(gates[:, 0 * H:1 * H])
            f_g = jax.nn.sigmoid(gates[:, 1 * H:2 * H])
            g_g = jnp.tanh(gates[:, 2 * H:3 * H])
            o_g = jax.nn.sigmoid(gates[:, 3 * H:4 * H])
            c = f_g * c + i_g * g_g
            h = o_g * jnp.tanh(c)
            outs.append(h)
        h_seq = jnp.stack(outs, axis=0)
    h_last = h_seq[-1]
    return jax.nn.sigmoid(h_last @ params["fc_w"].T + params["fc_b"])


# ------------------------------------------------------------------
if __name__ == "__main__":
    INPUT_SIZE = 16
    HIDDEN_SIZE = 32
    NUM_LAYERS = 2
    BATCH = 2
    SEQ = 8

    key = jax.random.PRNGKey(0)
    key_p, key_x = jax.random.split(key)
    params = init_discriminator_params(key_p, INPUT_SIZE, HIDDEN_SIZE, NUM_LAYERS)
    kparams = prepare_kernel_params(params, HIDDEN_SIZE)   # one-time, not per call
    x = jax.random.normal(key_x, (BATCH, SEQ, INPUT_SIZE), jnp.float32)

    out = discriminator_forward(kparams, x, batch_first=True)
    out = jax.block_until_ready(out)

    assert out.shape == (BATCH, 1), out.shape
    assert bool(jnp.all(jnp.isfinite(out)))
    ref = discriminator_forward_ref(params, x, batch_first=True)
    assert jnp.allclose(out, ref, atol=2e-2, rtol=2e-2), (out, ref)

    print("KERNEL_OK")
</pallas_src>

<mosaic_0001>
module attributes {stable_mosaic.version = 11 : i64} {
  func.func @kernel(%arg0: memref<64x16xbf16, #tpu.memory_space<vmem>>, %arg1: memref<16x128xbf16, #tpu.memory_space<vmem>>, %arg2: memref<32x128xbf16, #tpu.memory_space<vmem>>, %arg3: memref<1x128xf32, #tpu.memory_space<vmem>>, %arg4: memref<32x128xbf16, #tpu.memory_space<vmem>>, %arg5: memref<32x128xbf16, #tpu.memory_space<vmem>>, %arg6: memref<1x128xf32, #tpu.memory_space<vmem>>, %arg7: memref<32x128xbf16, #tpu.memory_space<vmem>>, %arg8: memref<1x128xf32, #tpu.memory_space<vmem>>, %arg9: memref<8x128xf32, #tpu.memory_space<vmem>>, %arg10: memref<64x32xf32, #tpu.memory_space<vmem>>) attributes {dimension_semantics = [], scalar_prefetch = 0 : i64, scratch_operands = 1 : i64, tpu.core_type = #tpu.core_type<tc>} {
    %c0 = arith.constant 0 : index
    %c0_0 = arith.constant 0 : index
    %0 = vector.load %arg1[%c0, %c0_0] : memref<16x128xbf16, #tpu.memory_space<vmem>>, vector<16x128xbf16>
    %c0_1 = arith.constant 0 : index
    %c0_2 = arith.constant 0 : index
    %1 = vector.load %arg2[%c0_1, %c0_2] : memref<32x128xbf16, #tpu.memory_space<vmem>>, vector<32x128xbf16>
    %c0_3 = arith.constant 0 : index
    %c0_4 = arith.constant 0 : index
    %2 = vector.load %arg3[%c0_3, %c0_4] : memref<1x128xf32, #tpu.memory_space<vmem>>, vector<1x128xf32>
    %c0_5 = arith.constant 0 : index
    %c0_6 = arith.constant 0 : index
    %3 = vector.load %arg0[%c0_5, %c0_6] : memref<64x16xbf16, #tpu.memory_space<vmem>>, vector<64x16xbf16>
    %cst = arith.constant dense<0.000000e+00> : vector<64x128xf32>
    %4 = tpu.matmul %3, %0, %cst {dimension_numbers = #tpu.dot_dimension_numbers<[1], [0], [0], [1], [0, 0, 1, 1], [], []>} : vector<64x16xbf16>, vector<16x128xbf16>, vector<64x128xf32> -> vector<64x128xf32>
    %5 = vector.broadcast %2 : vector<1x128xf32> to vector<64x128xf32>
    %6 = arith.addf %4, %5 : vector<64x128xf32>
    %cst_7 = arith.constant 0.000000e+00 : f32
    %7 = vector.broadcast %cst_7 : f32 to vector<8x32xf32>
    %cst_8 = arith.constant 0.000000e+00 : f32
    %8 = vector.broadcast %cst_8 : f32 to vector<8x32xf32>
    %9 = arith.truncf %7 : vector<8x32xf32> to vector<8x32xbf16>
    %10 = vector.extract_strided_slice %6 {offsets = [0, 0], sizes = [8, 128], strides = [1, 1]} : vector<64x128xf32> to vector<8x128xf32>
    %cst_9 = arith.constant dense<0.000000e+00> : vector<8x128xf32>
    %11 = tpu.matmul %9, %1, %cst_9 {dimension_numbers = #tpu.dot_dimension_numbers<[1], [0], [0], [1], [0, 0, 1, 1], [], []>} : vector<8x32xbf16>, vector<32x128xbf16>, vector<8x128xf32> -> vector<8x128xf32>
    %12 = arith.addf %10, %11 : vector<8x128xf32>
    %13 = arith.negf %12 : vector<8x128xf32>
    %14 = math.exp %13 : vector<8x128xf32>
    %cst_10 = arith.constant 1.000000e+00 : f32
    %15 = vector.broadcast %cst_10 : f32 to vector<8x128xf32>
    %16 = arith.addf %15, %14 : vector<8x128xf32>
    %17 = arith.divf %15, %16 : vector<8x128xf32>
    %18 = math.tanh %12 : vector<8x128xf32>
    %19 = vector.extract_strided_slice %17 {offsets = [0, 0], sizes = [8, 32], strides = [1, 1]} : vector<8x128xf32> to vector<8x32xf32>
    %20 = vector.extract_strided_slice %17 {offsets = [0, 32], sizes = [8, 32], strides = [1, 1]} : vector<8x128xf32> to vector<8x32xf32>
    %21 = vector.extract_strided_slice %18 {offsets = [0, 64], sizes = [8, 32], strides = [1, 1]} : vector<8x128xf32> to vector<8x32xf32>
    %22 = vector.extract_strided_slice %17 {offsets = [0, 96], sizes = [8, 32], strides = [1, 1]} : vector<8x128xf32> to vector<8x32xf32>
    %23 = arith.mulf %20, %8 : vector<8x32xf32>
    %24 = arith.mulf %19, %21 : vector<8x32xf32>
    %25 = arith.addf %23, %24 : vector<8x32xf32>
    %26 = math.tanh %25 : vector<8x32xf32>
    %27 = arith.mulf %22, %26 : vector<8x32xf32>
    %c0_11 = arith.constant 0 : index
    %c0_12 = arith.constant 0 : index
    %28 = vector.load %arg10[%c0_11, %c0_12] : memref<64x32xf32, #tpu.memory_space<vmem>>, vector<8x32xf32>
    tpu.vector_store %arg10[%c0_11, %c0_12], %27 {strides = array<i32>} : memref<64x32xf32, #tpu.memory_space<vmem>>, vector<8x32xf32>,
    %29 = arith.truncf %27 : vector<8x32xf32> to vector<8x32xbf16>
    %30 = vector.extract_strided_slice %6 {offsets = [8, 0], sizes = [8, 128], strides = [1, 1]} : vector<64x128xf32> to vector<8x128xf32>
    %cst_13 = arith.constant dense<0.000000e+00> : vector<8x128xf32>
    %31 = tpu.matmul %29, %1, %cst_13 {dimension_numbers = #tpu.dot_dimension_numbers<[1], [0], [0], [1], [0, 0, 1, 1], [], []>} : vector<8x32xbf16>, vector<32x128xbf16>, vector<8x128xf32> -> vector<8x128xf32>
    %32 = arith.addf %30, %31 : vector<8x128xf32>
    %33 = arith.negf %32 : vector<8x128xf32>
    %34 = math.exp %33 : vector<8x128xf32>
    %cst_14 = arith.constant 1.000000e+00 : f32
    %35 = vector.broadcast %cst_14 : f32 to vector<8x128xf32>
    %36 = arith.addf %35, %34 : vector<8x128xf32>
    %37 = arith.divf %35, %36 : vector<8x128xf32>
    %38 = math.tanh %32 : vector<8x128xf32>
    %39 = vector.extract_strided_slice %37 {offsets = [0, 0], sizes = [8, 32], strides = [1, 1]} : vector<8x128xf32> to vector<8x32xf32>
    %40 = vector.extract_strided_slice %37 {offsets = [0, 32], sizes = [8, 32], strides = [1, 1]} : vector<8x128xf32> to vector<8x32xf32>
    %41 = vector.extract_strided_slice %38 {offsets = [0, 64], sizes = [8, 32], strides = [1, 1]} : vector<8x128xf32> to vector<8x32xf32>
    %42 = vector.extract_strided_slice %37 {offsets = [0, 96], sizes = [8, 32], strides = [1, 1]} : vector<8x128xf32> to vector<8x32xf32>
    %43 = arith.mulf %40, %25 : vector<8x32xf32>
    %44 = arith.mulf %39, %41 : vector<8x32xf32>
    %45 = arith.addf %43, %44 : vector<8x32xf32>
    %46 = math.tanh %45 : vector<8x32xf32>
    %47 = arith.mulf %42, %46 : vector<8x32xf32>
    %c8 = arith.constant 8 : index
    %c0_15 = arith.constant 0 : index
    %48 = vector.load %arg10[%c8, %c0_15] : memref<64x32xf32, #tpu.memory_space<vmem>>, vector<8x32xf32>
    tpu.vector_store %arg10[%c8, %c0_15], %47 {strides = array<i32>} : memref<64x32xf32, #tpu.memory_space<vmem>>, vector<8x32xf32>,
    %49 = arith.truncf %47 : vector<8x32xf32> to vector<8x32xbf16>
    %50 = vector.extract_strided_slice %6 {offsets = [16, 0], sizes = [8, 128], strides = [1, 1]} : vector<64x128xf32> to vector<8x128xf32>
    %cst_16 = arith.constant dense<0.000000e+00> : vector<8x128xf32>
    %51 = tpu.matmul %49, %1, %cst_16 {dimension_numbers = #tpu.dot_dimension_numbers<[1], [0], [0], [1], [0, 0, 1, 1], [], []>} : vector<8x32xbf16>, vector<32x128xbf16>, vector<8x128xf32> -> vector<8x128xf32>
    %52 = arith.addf %50, %51 : vector<8x128xf32>
    %53 = arith.negf %52 : vector<8x128xf32>
    %54 = math.exp %53 : vector<8x128xf32>
    %cst_17 = arith.constant 1.000000e+00 : f32
    %55 = vector.broadcast %cst_17 : f32 to vector<8x128xf32>
    %56 = arith.addf %55, %54 : vector<8x128xf32>
    %57 = arith.divf %55, %56 : vector<8x128xf32>
    %58 = math.tanh %52 : vector<8x128xf32>
    %59 = vector.extract_strided_slice %57 {offsets = [0, 0], sizes = [8, 32], strides = [1, 1]} : vector<8x128xf32> to vector<8x32xf32>
    %60 = vector.extract_strided_slice %57 {offsets = [0, 32], sizes = [8, 32], strides = [1, 1]} : vector<8x128xf32> to vector<8x32xf32>
    %61 = vector.extract_strided_slice %58 {offsets = [0, 64], sizes = [8, 32], strides = [1, 1]} : vector<8x128xf32> to vector<8x32xf32>
    %62 = vector.extract_strided_slice %57 {offsets = [0, 96], sizes = [8, 32], strides = [1, 1]} : vector<8x128xf32> to vector<8x32xf32>
    %63 = arith.mulf %60, %45 : vector<8x32xf32>
    %64 = arith.mulf %59, %61 : vector<8x32xf32>
    %65 = arith.addf %63, %64 : vector<8x32xf32>
    %66 = math.tanh %65 : vector<8x32xf32>
    %67 = arith.mulf %62, %66 : vector<8x32xf32>
    %c16 = arith.constant 16 : index
    %c0_18 = arith.constant 0 : index
    %68 = vector.load %arg10[%c16, %c0_18] : memref<64x32xf32, #tpu.memory_space<vmem>>, vector<8x32xf32>
    tpu.vector_store %arg10[%c16, %c0_18], %67 {strides = array<i32>} : memref<64x32xf32, #tpu.memory_space<vmem>>, vector<8x32xf32>,
    %69 = arith.truncf %67 : vector<8x32xf32> to vector<8x32xbf16>
    %70 = vector.extract_strided_slice %6 {offsets = [24, 0], sizes = [8, 128], strides = [1, 1]} : vector<64x128xf32> to vector<8x128xf32>
    %cst_19 = arith.constant dense<0.000000e+00> : vector<8x128xf32>
    %71 = tpu.matmul %69, %1, %cst_19 {dimension_numbers = #tpu.dot_dimension_numbers<[1], [0], [0], [1], [0, 0, 1, 1], [], []>} : vector<8x32xbf16>, vector<32x128xbf16>, vector<8x128xf32> -> vector<8x128xf32>
    %72 = arith.addf %70, %71 : vector<8x128xf32>
    %73 = arith.negf %72 : vector<8x128xf32>
    %74 = math.exp %73 : vector<8x128xf32>
    %cst_20 = arith.constant 1.000000e+00 : f32
    %75 = vector.broadcast %cst_20 : f32 to vector<8x128xf32>
    %76 = arith.addf %75, %74 : vector<8x128xf32>
    %77 = arith.divf %75, %76 : vector<8x128xf32>
    %78 = math.tanh %72 : vector<8x128xf32>
    %79 = vector.extract_strided_slice %77 {offsets = [0, 0], sizes = [8, 32], strides = [1, 1]} : vector<8x128xf32> to vector<8x32xf32>
    %80 = vector.extract_strided_slice %77 {offsets = [0, 32], sizes = [8, 32], strides = [1, 1]} : vector<8x128xf32> to vector<8x32xf32>
    %81 = vector.extract_strided_slice %78 {offsets = [0, 64], sizes = [8, 32], strides = [1, 1]} : vector<8x128xf32> to vector<8x32xf32>
    %82 = vector.extract_strided_slice %77 {offsets = [0, 96], sizes = [8, 32], strides = [1, 1]} : vector<8x128xf32> to vector<8x32xf32>
    %83 = arith.mulf %80, %65 : vector<8x32xf32>
    %84 = arith.mulf %79, %81 : vector<8x32xf32>
    %85 = arith.addf %83, %84 : vector<8x32xf32>
    %86 = math.tanh %85 : vector<8x32xf32>
    %87 = arith.mulf %82, %86 : vector<8x32xf32>
    %c24 = arith.constant 24 : index
    %c0_21 = arith.constant 0 : index
    %88 = vector.load %arg10[%c24, %c0_21] : memref<64x32xf32, #tpu.memory_space<vmem>>, vector<8x32xf32>
    tpu.vector_store %arg10[%c24, %c0_21], %87 {strides = array<i32>} : memref<64x32xf32, #tpu.memory_space<vmem>>, vector<8x32xf32>,
    %89 = arith.truncf %87 : vector<8x32xf32> to vector<8x32xbf16>
    %90 = vector.extract_strided_slice %6 {offsets = [32, 0], sizes = [8, 128], strides = [1, 1]} : vector<64x128xf32> to vector<8x128xf32>
    %cst_22 = arith.constant dense<0.000000e+00> : vector<8x128xf32>
    %91 = tpu.matmul %89, %1, %cst_22 {dimension_numbers = #tpu.dot_dimension_numbers<[1], [0], [0], [1], [0, 0, 1, 1], [], []>} : vector<8x32xbf16>, vector<32x128xbf16>, vector<8x128xf32> -> vector<8x128xf32>
    %92 = arith.addf %90, %91 : vector<8x128xf32>
    %93 = arith.negf %92 : vector<8x128xf32>
    %94 = math.exp %93 : vector<8x128xf32>
    %cst_23 = arith.constant 1.000000e+00 : f32
    %95 = vector.broadcast %cst_23 : f32 to vector<8x128xf32>
    %96 = arith.addf %95, %94 : vector<8x128xf32>
    %97 = arith.divf %95, %96 : vector<8x128xf32>
    %98 = math.tanh %92 : vector<8x128xf32>
    %99 = vector.extract_strided_slice %97 {offsets = [0, 0], sizes = [8, 32], strides = [1, 1]} : vector<8x128xf32> to vector<8x32xf32>
    %100 = vector.extract_strided_slice %97 {offsets = [0, 32], sizes = [8, 32], strides = [1, 1]} : vector<8x128xf32> to vector<8x32xf32>
    %101 = vector.extract_strided_slice %98 {offsets = [0, 64], sizes = [8, 32], strides = [1, 1]} : vector<8x128xf32> to vector<8x32xf32>
    %102 = vector.extract_strided_slice %97 {offsets = [0, 96], sizes = [8, 32], strides = [1, 1]} : vector<8x128xf32> to vector<8x32xf32>
    %103 = arith.mulf %100, %85 : vector<8x32xf32>
    %104 = arith.mulf %99, %101 : vector<8x32xf32>
    %105 = arith.addf %103, %104 : vector<8x32xf32>
    %106 = math.tanh %105 : vector<8x32xf32>
    %107 = arith.mulf %102, %106 : vector<8x32xf32>
    %c32 = arith.constant 32 : index
    %c0_24 = arith.constant 0 : index
    %108 = vector.load %arg10[%c32, %c0_24] : memref<64x32xf32, #tpu.memory_space<vmem>>, vector<8x32xf32>
    tpu.vector_store %arg10[%c32, %c0_24], %107 {strides = array<i32>} : memref<64x32xf32, #tpu.memory_space<vmem>>, vector<8x32xf32>,
    %109 = arith.truncf %107 : vector<8x32xf32> to vector<8x32xbf16>
    %110 = vector.extract_strided_slice %6 {offsets = [40, 0], sizes = [8, 128], strides = [1, 1]} : vector<64x128xf32> to vector<8x128xf32>
    %cst_25 = arith.constant dense<0.000000e+00> : vector<8x128xf32>
    %111 = tpu.matmul %109, %1, %cst_25 {dimension_numbers = #tpu.dot_dimension_numbers<[1], [0], [0], [1], [0, 0, 1, 1], [], []>} : vector<8x32xbf16>, vector<32x128xbf16>, vector<8x128xf32> -> vector<8x128xf32>
    %112 = arith.addf %110, %111 : vector<8x128xf32>
    %113 = arith.negf %112 : vector<8x128xf32>
    %114 = math.exp %113 : vector<8x128xf32>
    %cst_26 = arith.constant 1.000000e+00 : f32
    %115 = vector.broadcast %cst_26 : f32 to vector<8x128xf32>
    %116 = arith.addf %115, %114 : vector<8x128xf32>
    %117 = arith.divf %115, %116 : vector<8x128xf32>
    %118 = math.tanh %112 : vector<8x128xf32>
    %119 = vector.extract_strided_slice %117 {offsets = [0, 0], sizes = [8, 32], strides = [1, 1]} : vector<8x128xf32> to vector<8x32xf32>
    %120 = vector.extract_strided_slice %117 {offsets = [0, 32], sizes = [8, 32], strides = [1, 1]} : vector<8x128xf32> to vector<8x32xf32>
    %121 = vector.extract_strided_slice %118 {offsets = [0, 64], sizes = [8, 32], strides = [1, 1]} : vector<8x128xf32> to vector<8x32xf32>
    %122 = vector.extract_strided_slice %117 {offsets = [0, 96], sizes = [8, 32], strides = [1, 1]} : vector<8x128xf32> to vector<8x32xf32>
    %123 = arith.mulf %120, %105 : vector<8x32xf32>
    %124 = arith.mulf %119, %121 : vector<8x32xf32>
    %125 = arith.addf %123, %124 : vector<8x32xf32>
    %126 = math.tanh %125 : vector<8x32xf32>
    %127 = arith.mulf %122, %126 : vector<8x32xf32>
    %c40 = arith.constant 40 : index
    %c0_27 = arith.constant 0 : index
    %128 = vector.load %arg10[%c40, %c0_27] : memref<64x32xf32, #tpu.memory_space<vmem>>, vector<8x32xf32>
    tpu.vector_store %arg10[%c40, %c0_27], %127 {strides = array<i32>} : memref<64x32xf32, #tpu.memory_space<vmem>>, vector<8x32xf32>,
    %129 = arith.truncf %127 : vector<8x32xf32> to vector<8x32xbf16>
    %130 = vector.extract_strided_slice %6 {offsets = [48, 0], sizes = [8, 128], strides = [1, 1]} : vector<64x128xf32> to vector<8x128xf32>
    %cst_28 = arith.constant dense<0.000000e+00> : vector<8x128xf32>
    %131 = tpu.matmul %129, %1, %cst_28 {dimension_numbers = #tpu.dot_dimension_numbers<[1], [0], [0], [1], [0, 0, 1, 1], [], []>} : vector<8x32xbf16>, vector<32x128xbf16>, vector<8x128xf32> -> vector<8x128xf32>
    %132 = arith.addf %130, %131 : vector<8x128xf32>
    %133 = arith.negf %132 : vector<8x128xf32>
    %134 = math.exp %133 : vector<8x128xf32>
    %cst_29 = arith.constant 1.000000e+00 : f32
    %135 = vector.broadcast %cst_29 : f32 to vector<8x128xf32>
    %136 = arith.addf %135, %134 : vector<8x128xf32>
    %137 = arith.divf %135, %136 : vector<8x128xf32>
    %138 = math.tanh %132 : vector<8x128xf32>
    %139 = vector.extract_strided_slice %137 {offsets = [0, 0], sizes = [8, 32], strides = [1, 1]} : vector<8x128xf32> to vector<8x32xf32>
    %140 = vector.extract_strided_slice %137 {offsets = [0, 32], sizes = [8, 32], strides = [1, 1]} : vector<8x128xf32> to vector<8x32xf32>
    %141 = vector.extract_strided_slice %138 {offsets = [0, 64], sizes = [8, 32], strides = [1, 1]} : vector<8x128xf32> to vector<8x32xf32>
    %142 = vector.extract_strided_slice %137 {offsets = [0, 96], sizes = [8, 32], strides = [1, 1]} : vector<8x128xf32> to vector<8x32xf32>
    %143 = arith.mulf %140, %125 : vector<8x32xf32>
    %144 = arith.mulf %139, %141 : vector<8x32xf32>
    %145 = arith.addf %143, %144 : vector<8x32xf32>
    %146 = math.tanh %145 : vector<8x32xf32>
    %147 = arith.mulf %142, %146 : vector<8x32xf32>
    %c48 = arith.constant 48 : index
    %c0_30 = arith.constant 0 : index
    %148 = vector.load %arg10[%c48, %c0_30] : memref<64x32xf32, #tpu.memory_space<vmem>>, vector<8x32xf32>
    tpu.vector_store %arg10[%c48, %c0_30], %147 {strides = array<i32>} : memref<64x32xf32, #tpu.memory_space<vmem>>, vector<8x32xf32>,
    %149 = arith.truncf %147 : vector<8x32xf32> to vector<8x32xbf16>
    %150 = vector.extract_strided_slice %6 {offsets = [56, 0], sizes = [8, 128], strides = [1, 1]} : vector<64x128xf32> to vector<8x128xf32>
    %cst_31 = arith.constant dense<0.000000e+00> : vector<8x128xf32>
    %151 = tpu.matmul %149, %1, %cst_31 {dimension_numbers = #tpu.dot_dimension_numbers<[1], [0], [0], [1], [0, 0, 1, 1], [], []>} : vector<8x32xbf16>, vector<32x128xbf16>, vector<8x128xf32> -> vector<8x128xf32>
    %152 = arith.addf %150, %151 : vector<8x128xf32>
    %153 = arith.negf %152 : vector<8x128xf32>
    %154 = math.exp %153 : vector<8x128xf32>
    %cst_32 = arith.constant 1.000000e+00 : f32
    %155 = vector.broadcast %cst_32 : f32 to vector<8x128xf32>
    %156 = arith.addf %155, %154 : vector<8x128xf32>
    %157 = arith.divf %155, %156 : vector<8x128xf32>
    %158 = math.tanh %152 : vector<8x128xf32>
    %159 = vector.extract_strided_slice %157 {offsets = [0, 0], sizes = [8, 32], strides = [1, 1]} : vector<8x128xf32> to vector<8x32xf32>
    %160 = vector.extract_strided_slice %157 {offsets = [0, 32], sizes = [8, 32], strides = [1, 1]} : vector<8x128xf32> to vector<8x32xf32>
    %161 = vector.extract_strided_slice %158 {offsets = [0, 64], sizes = [8, 32], strides = [1, 1]} : vector<8x128xf32> to vector<8x32xf32>
    %162 = vector.extract_strided_slice %157 {offsets = [0, 96], sizes = [8, 32], strides = [1, 1]} : vector<8x128xf32> to vector<8x32xf32>
    %163 = arith.mulf %160, %145 : vector<8x32xf32>
    %164 = arith.mulf %159, %161 : vector<8x32xf32>
    %165 = arith.addf %163, %164 : vector<8x32xf32>
    %166 = math.tanh %165 : vector<8x32xf32>
    %167 = arith.mulf %162, %166 : vector<8x32xf32>
    %c56 = arith.constant 56 : index
    %c0_33 = arith.constant 0 : index
    %168 = vector.load %arg10[%c56, %c0_33] : memref<64x32xf32, #tpu.memory_space<vmem>>, vector<8x32xf32>
    tpu.vector_store %arg10[%c56, %c0_33], %167 {strides = array<i32>} : memref<64x32xf32, #tpu.memory_space<vmem>>, vector<8x32xf32>,
    %c0_34 = arith.constant 0 : index
    %c0_35 = arith.constant 0 : index
    %169 = vector.load %arg4[%c0_34, %c0_35] : memref<32x128xbf16, #tpu.memory_space<vmem>>, vector<32x128xbf16>
    %c0_36 = arith.constant 0 : index
    %c0_37 = arith.constant 0 : index
    %170 = vector.load %arg5[%c0_36, %c0_37] : memref<32x128xbf16, #tpu.memory_space<vmem>>, vector<32x128xbf16>
    %c0_38 = arith.constant 0 : index
    %c0_39 = arith.constant 0 : index
    %171 = vector.load %arg6[%c0_38, %c0_39] : memref<1x128xf32, #tpu.memory_space<vmem>>, vector<1x128xf32>
    %c0_40 = arith.constant 0 : index
    %c0_41 = arith.constant 0 : index
    %172 = vector.load %arg10[%c0_40, %c0_41] : memref<64x32xf32, #tpu.memory_space<vmem>>, vector<64x32xf32>
    %173 = arith.truncf %172 : vector<64x32xf32> to vector<64x32xbf16>
    %cst_42 = arith.constant dense<0.000000e+00> : vector<64x128xf32>
    %174 = tpu.matmul %173, %169, %cst_42 {dimension_numbers = #tpu.dot_dimension_numbers<[1], [0], [0], [1], [0, 0, 1, 1], [], []>} : vector<64x32xbf16>, vector<32x128xbf16>, vector<64x128xf32> -> vector<64x128xf32>
    %175 = vector.broadcast %171 : vector<1x128xf32> to vector<64x128xf32>
    %176 = arith.addf %174, %175 : vector<64x128xf32>
    %cst_43 = arith.constant 0.000000e+00 : f32
    %177 = vector.broadcast %cst_43 : f32 to vector<8x32xf32>
    %cst_44 = arith.constant 0.000000e+00 : f32
    %178 = vector.broadcast %cst_44 : f32 to vector<8x32xf32>
    %179 = arith.truncf %177 : vector<8x32xf32> to vector<8x32xbf16>
    %180 = vector.extract_strided_slice %176 {offsets = [0, 0], sizes = [8, 128], strides = [1, 1]} : vector<64x128xf32> to vector<8x128xf32>
    %cst_45 = arith.constant dense<0.000000e+00> : vector<8x128xf32>
    %181 = tpu.matmul %179, %170, %cst_45 {dimension_numbers = #tpu.dot_dimension_numbers<[1], [0], [0], [1], [0, 0, 1, 1], [], []>} : vector<8x32xbf16>, vector<32x128xbf16>, vector<8x128xf32> -> vector<8x128xf32>
    %182 = arith.addf %180, %181 : vector<8x128xf32>
    %183 = arith.negf %182 : vector<8x128xf32>
    %184 = math.exp %183 : vector<8x128xf32>
    %cst_46 = arith.constant 1.000000e+00 : f32
    %185 = vector.broadcast %cst_46 : f32 to vector<8x128xf32>
    %186 = arith.addf %185, %184 : vector<8x128xf32>
    %187 = arith.divf %185, %186 : vector<8x128xf32>
    %188 = math.tanh %182 : vector<8x128xf32>
    %189 = vector.extract_strided_slice %187 {offsets = [0, 0], sizes = [8, 32], strides = [1, 1]} : vector<8x128xf32> to vector<8x32xf32>
    %190 = vector.extract_strided_slice %187 {offsets = [0, 32], sizes = [8, 32], strides = [1, 1]} : vector<8x128xf32> to vector<8x32xf32>
    %191 = vector.extract_strided_slice %188 {offsets = [0, 64], sizes = [8, 32], strides = [1, 1]} : vector<8x128xf32> to vector<8x32xf32>
    %192 = vector.extract_strided_slice %187 {offsets = [0, 96], sizes = [8, 32], strides = [1, 1]} : vector<8x128xf32> to vector<8x32xf32>
    %193 = arith.mulf %190, %178 : vector<8x32xf32>
    %194 = arith.mulf %189, %191 : vector<8x32xf32>
    %195 = arith.addf %193, %194 : vector<8x32xf32>
    %196 = math.tanh %195 : vector<8x32xf32>
    %197 = arith.mulf %192, %196 : vector<8x32xf32>
    %198 = arith.truncf %197 : vector<8x32xf32> to vector<8x32xbf16>
    %199 = vector.extract_strided_slice %176 {offsets = [8, 0], sizes = [8, 128], strides = [1, 1]} : vector<64x128xf32> to vector<8x128xf32>
    %cst_47 = arith.constant dense<0.000000e+00> : vector<8x128xf32>
    %200 = tpu.matmul %198, %170, %cst_47 {dimension_numbers = #tpu.dot_dimension_numbers<[1], [0], [0], [1], [0, 0, 1, 1], [], []>} : vector<8x32xbf16>, vector<32x128xbf16>, vector<8x128xf32> -> vector<8x128xf32>
    %201 = arith.addf %199, %200 : vector<8x128xf32>
    %202 = arith.negf %201 : vector<8x128xf32>
    %203 = math.exp %202 : vector<8x128xf32>
    %cst_48 = arith.constant 1.000000e+00 : f32
    %204 = vector.broadcast %cst_48 : f32 to vector<8x128xf32>
    %205 = arith.addf %204, %203 : vector<8x128xf32>
    %206 = arith.divf %204, %205 : vector<8x128xf32>
    %207 = math.tanh %201 : vector<8x128xf32>
    %208 = vector.extract_strided_slice %206 {offsets = [0, 0], sizes = [8, 32], strides = [1, 1]} : vector<8x128xf32> to vector<8x32xf32>
    %209 = vector.extract_strided_slice %206 {offsets = [0, 32], sizes = [8, 32], strides = [1, 1]} : vector<8x128xf32> to vector<8x32xf32>
    %210 = vector.extract_strided_slice %207 {offsets = [0, 64], sizes = [8, 32], strides = [1, 1]} : vector<8x128xf32> to vector<8x32xf32>
    %211 = vector.extract_strided_slice %206 {offsets = [0, 96], sizes = [8, 32], strides = [1, 1]} : vector<8x128xf32> to vector<8x32xf32>
    %212 = arith.mulf %209, %195 : vector<8x32xf32>
    %213 = arith.mulf %208, %210 : vector<8x32xf32>
    %214 = arith.addf %212, %213 : vector<8x32xf32>
    %215 = math.tanh %214 : vector<8x32xf32>
    %216 = arith.mulf %211, %215 : vector<8x32xf32>
    %217 = arith.truncf %216 : vector<8x32xf32> to vector<8x32xbf16>
    %218 = vector.extract_strided_slice %176 {offsets = [16, 0], sizes = [8, 128], strides = [1, 1]} : vector<64x128xf32> to vector<8x128xf32>
    %cst_49 = arith.constant dense<0.000000e+00> : vector<8x128xf32>
    %219 = tpu.matmul %217, %170, %cst_49 {dimension_numbers = #tpu.dot_dimension_numbers<[1], [0], [0], [1], [0, 0, 1, 1], [], []>} : vector<8x32xbf16>, vector<32x128xbf16>, vector<8x128xf32> -> vector<8x128xf32>
    %220 = arith.addf %218, %219 : vector<8x128xf32>
    %221 = arith.negf %220 : vector<8x128xf32>
    %222 = math.exp %221 : vector<8x128xf32>
    %cst_50 = arith.constant 1.000000e+00 : f32
    %223 = vector.broadcast %cst_50 : f32 to vector<8x128xf32>
    %224 = arith.addf %223, %222 : vector<8x128xf32>
    %225 = arith.divf %223, %224 : vector<8x128xf32>
    %226 = math.tanh %220 : vector<8x128xf32>
    %227 = vector.extract_strided_slice %225 {offsets = [0, 0], sizes = [8, 32], strides = [1, 1]} : vector<8x128xf32> to vector<8x32xf32>
    %228 = vector.extract_strided_slice %225 {offsets = [0, 32], sizes = [8, 32], strides = [1, 1]} : vector<8x128xf32> to vector<8x32xf32>
    %229 = vector.extract_strided_slice %226 {offsets = [0, 64], sizes = [8, 32], strides = [1, 1]} : vector<8x128xf32> to vector<8x32xf32>
    %230 = vector.extract_strided_slice %225 {offsets = [0, 96], sizes = [8, 32], strides = [1, 1]} : vector<8x128xf32> to vector<8x32xf32>
    %231 = arith.mulf %228, %214 : vector<8x32xf32>
    %232 = arith.mulf %227, %229 : vector<8x32xf32>
    %233 = arith.addf %231, %232 : vector<8x32xf32>
    %234 = math.tanh %233 : vector<8x32xf32>
    %235 = arith.mulf %230, %234 : vector<8x32xf32>
    %236 = arith.truncf %235 : vector<8x32xf32> to vector<8x32xbf16>
    %237 = vector.extract_strided_slice %176 {offsets = [24, 0], sizes = [8, 128], strides = [1, 1]} : vector<64x128xf32> to vector<8x128xf32>
    %cst_51 = arith.constant dense<0.000000e+00> : vector<8x128xf32>
    %238 = tpu.matmul %236, %170, %cst_51 {dimension_numbers = #tpu.dot_dimension_numbers<[1], [0], [0], [1], [0, 0, 1, 1], [], []>} : vector<8x32xbf16>, vector<32x128xbf16>, vector<8x128xf32> -> vector<8x128xf32>
    %239 = arith.addf %237, %238 : vector<8x128xf32>
    %240 = arith.negf %239 : vector<8x128xf32>
    %241 = math.exp %240 : vector<8x128xf32>
    %cst_52 = arith.constant 1.000000e+00 : f32
    %242 = vector.broadcast %cst_52 : f32 to vector<8x128xf32>
    %243 = arith.addf %242, %241 : vector<8x128xf32>
    %244 = arith.divf %242, %243 : vector<8x128xf32>
    %245 = math.tanh %239 : vector<8x128xf32>
    %246 = vector.extract_strided_slice %244 {offsets = [0, 0], sizes = [8, 32], strides = [1, 1]} : vector<8x128xf32> to vector<8x32xf32>
    %247 = vector.extract_strided_slice %244 {offsets = [0, 32], sizes = [8, 32], strides = [1, 1]} : vector<8x128xf32> to vector<8x32xf32>
    %248 = vector.extract_strided_slice %245 {offsets = [0, 64], sizes = [8, 32], strides = [1, 1]} : vector<8x128xf32> to vector<8x32xf32>
    %249 = vector.extract_strided_slice %244 {offsets = [0, 96], sizes = [8, 32], strides = [1, 1]} : vector<8x128xf32> to vector<8x32xf32>
    %250 = arith.mulf %247, %233 : vector<8x32xf32>
    %251 = arith.mulf %246, %248 : vector<8x32xf32>
    %252 = arith.addf %250, %251 : vector<8x32xf32>
    %253 = math.tanh %252 : vector<8x32xf32>
    %254 = arith.mulf %249, %253 : vector<8x32xf32>
    %255 = arith.truncf %254 : vector<8x32xf32> to vector<8x32xbf16>
    %256 = vector.extract_strided_slice %176 {offsets = [32, 0], sizes = [8, 128], strides = [1, 1]} : vector<64x128xf32> to vector<8x128xf32>
    %cst_53 = arith.constant dense<0.000000e+00> : vector<8x128xf32>
    %257 = tpu.matmul %255, %170, %cst_53 {dimension_numbers = #tpu.dot_dimension_numbers<[1], [0], [0], [1], [0, 0, 1, 1], [], []>} : vector<8x32xbf16>, vector<32x128xbf16>, vector<8x128xf32> -> vector<8x128xf32>
    %258 = arith.addf %256, %257 : vector<8x128xf32>
    %259 = arith.negf %258 : vector<8x128xf32>
    %260 = math.exp %259 : vector<8x128xf32>
    %cst_54 = arith.constant 1.000000e+00 : f32
    %261 = vector.broadcast %cst_54 : f32 to vector<8x128xf32>
    %262 = arith.addf %261, %260 : vector<8x128xf32>
    %263 = arith.divf %261, %262 : vector<8x128xf32>
    %264 = math.tanh %258 : vector<8x128xf32>
    %265 = vector.extract_strided_slice %263 {offsets = [0, 0], sizes = [8, 32], strides = [1, 1]} : vector<8x128xf32> to vector<8x32xf32>
    %266 = vector.extract_strided_slice %263 {offsets = [0, 32], sizes = [8, 32], strides = [1, 1]} : vector<8x128xf32> to vector<8x32xf32>
    %267 = vector.extract_strided_slice %264 {offsets = [0, 64], sizes = [8, 32], strides = [1, 1]} : vector<8x128xf32> to vector<8x32xf32>
    %268 = vector.extract_strided_slice %263 {offsets = [0, 96], sizes = [8, 32], strides = [1, 1]} : vector<8x128xf32> to vector<8x32xf32>
    %269 = arith.mulf %266, %252 : vector<8x32xf32>
    %270 = arith.mulf %265, %267 : vector<8x32xf32>
    %271 = arith.addf %269, %270 : vector<8x32xf32>
    %272 = math.tanh %271 : vector<8x32xf32>
    %273 = arith.mulf %268, %272 : vector<8x32xf32>
    %274 = arith.truncf %273 : vector<8x32xf32> to vector<8x32xbf16>
    %275 = vector.extract_strided_slice %176 {offsets = [40, 0], sizes = [8, 128], strides = [1, 1]} : vector<64x128xf32> to vector<8x128xf32>
    %cst_55 = arith.constant dense<0.000000e+00> : vector<8x128xf32>
    %276 = tpu.matmul %274, %170, %cst_55 {dimension_numbers = #tpu.dot_dimension_numbers<[1], [0], [0], [1], [0, 0, 1, 1], [], []>} : vector<8x32xbf16>, vector<32x128xbf16>, vector<8x128xf32> -> vector<8x128xf32>
    %277 = arith.addf %275, %276 : vector<8x128xf32>
    %278 = arith.negf %277 : vector<8x128xf32>
    %279 = math.exp %278 : vector<8x128xf32>
    %cst_56 = arith.constant 1.000000e+00 : f32
    %280 = vector.broadcast %cst_56 : f32 to vector<8x128xf32>
    %281 = arith.addf %280, %279 : vector<8x128xf32>
    %282 = arith.divf %280, %281 : vector<8x128xf32>
    %283 = math.tanh %277 : vector<8x128xf32>
    %284 = vector.extract_strided_slice %282 {offsets = [0, 0], sizes = [8, 32], strides = [1, 1]} : vector<8x128xf32> to vector<8x32xf32>
    %285 = vector.extract_strided_slice %282 {offsets = [0, 32], sizes = [8, 32], strides = [1, 1]} : vector<8x128xf32> to vector<8x32xf32>
    %286 = vector.extract_strided_slice %283 {offsets = [0, 64], sizes = [8, 32], strides = [1, 1]} : vector<8x128xf32> to vector<8x32xf32>
    %287 = vector.extract_strided_slice %282 {offsets = [0, 96], sizes = [8, 32], strides = [1, 1]} : vector<8x128xf32> to vector<8x32xf32>
    %288 = arith.mulf %285, %271 : vector<8x32xf32>
    %289 = arith.mulf %284, %286 : vector<8x32xf32>
    %290 = arith.addf %288, %289 : vector<8x32xf32>
    %291 = math.tanh %290 : vector<8x32xf32>
    %292 = arith.mulf %287, %291 : vector<8x32xf32>
    %293 = arith.truncf %292 : vector<8x32xf32> to vector<8x32xbf16>
    %294 = vector.extract_strided_slice %176 {offsets = [48, 0], sizes = [8, 128], strides = [1, 1]} : vector<64x128xf32> to vector<8x128xf32>
    %cst_57 = arith.constant dense<0.000000e+00> : vector<8x128xf32>
    %295 = tpu.matmul %293, %170, %cst_57 {dimension_numbers = #tpu.dot_dimension_numbers<[1], [0], [0], [1], [0, 0, 1, 1], [], []>} : vector<8x32xbf16>, vector<32x128xbf16>, vector<8x128xf32> -> vector<8x128xf32>
    %296 = arith.addf %294, %295 : vector<8x128xf32>
    %297 = arith.negf %296 : vector<8x128xf32>
    %298 = math.exp %297 : vector<8x128xf32>
    %cst_58 = arith.constant 1.000000e+00 : f32
    %299 = vector.broadcast %cst_58 : f32 to vector<8x128xf32>
    %300 = arith.addf %299, %298 : vector<8x128xf32>
    %301 = arith.divf %299, %300 : vector<8x128xf32>
    %302 = math.tanh %296 : vector<8x128xf32>
    %303 = vector.extract_strided_slice %301 {offsets = [0, 0], sizes = [8, 32], strides = [1, 1]} : vector<8x128xf32> to vector<8x32xf32>
    %304 = vector.extract_strided_slice %301 {offsets = [0, 32], sizes = [8, 32], strides = [1, 1]} : vector<8x128xf32> to vector<8x32xf32>
    %305 = vector.extract_strided_slice %302 {offsets = [0, 64], sizes = [8, 32], strides = [1, 1]} : vector<8x128xf32> to vector<8x32xf32>
    %306 = vector.extract_strided_slice %301 {offsets = [0, 96], sizes = [8, 32], strides = [1, 1]} : vector<8x128xf32> to vector<8x32xf32>
    %307 = arith.mulf %304, %290 : vector<8x32xf32>
    %308 = arith.mulf %303, %305 : vector<8x32xf32>
    %309 = arith.addf %307, %308 : vector<8x32xf32>
    %310 = math.tanh %309 : vector<8x32xf32>
    %311 = arith.mulf %306, %310 : vector<8x32xf32>
    %312 = arith.truncf %311 : vector<8x32xf32> to vector<8x32xbf16>
    %313 = vector.extract_strided_slice %176 {offsets = [56, 0], sizes = [8, 128], strides = [1, 1]} : vector<64x128xf32> to vector<8x128xf32>
    %cst_59 = arith.constant dense<0.000000e+00> : vector<8x128xf32>
    %314 = tpu.matmul %312, %170, %cst_59 {dimension_numbers = #tpu.dot_dimension_numbers<[1], [0], [0], [1], [0, 0, 1, 1], [], []>} : vector<8x32xbf16>, vector<32x128xbf16>, vector<8x128xf32> -> vector<8x128xf32>
    %315 = arith.addf %313, %314 : vector<8x128xf32>
    %316 = arith.negf %315 : vector<8x128xf32>
    %317 = math.exp %316 : vector<8x128xf32>
    %cst_60 = arith.constant 1.000000e+00 : f32
    %318 = vector.broadcast %cst_60 : f32 to vector<8x128xf32>
    %319 = arith.addf %318, %317 : vector<8x128xf32>
    %320 = arith.divf %318, %319 : vector<8x128xf32>
    %321 = math.tanh %315 : vector<8x128xf32>
    %322 = vector.extract_strided_slice %320 {offsets = [0, 0], sizes = [8, 32], strides = [1, 1]} : vector<8x128xf32> to vector<8x32xf32>
    %323 = vector.extract_strided_slice %320 {offsets = [0, 32], sizes = [8, 32], strides = [1, 1]} : vector<8x128xf32> to vector<8x32xf32>
    %324 = vector.extract_strided_slice %321 {offsets = [0, 64], sizes = [8, 32], strides = [1, 1]} : vector<8x128xf32> to vector<8x32xf32>
    %325 = vector.extract_strided_slice %320 {offsets = [0, 96], sizes = [8, 32], strides = [1, 1]} : vector<8x128xf32> to vector<8x32xf32>
    %326 = arith.mulf %323, %309 : vector<8x32xf32>
    %327 = arith.mulf %322, %324 : vector<8x32xf32>
    %328 = arith.addf %326, %327 : vector<8x32xf32>
    %329 = math.tanh %328 : vector<8x32xf32>
    %330 = arith.mulf %325, %329 : vector<8x32xf32>
    %331 = arith.truncf %330 : vector<8x32xf32> to vector<8x32xbf16>
    %c0_61 = arith.constant 0 : index
    %c0_62 = arith.constant 0 : index
    %332 = vector.load %arg7[%c0_61, %c0_62] : memref<32x128xbf16, #tpu.memory_space<vmem>>, vector<32x128xbf16>
    %cst_63 = arith.constant dense<0.000000e+00> : vector<8x128xf32>
    %333 = tpu.matmul %331, %332, %cst_63 {dimension_numbers = #tpu.dot_dimension_numbers<[1], [0], [0], [1], [0, 0, 1, 1], [], []>} : vector<8x32xbf16>, vector<32x128xbf16>, vector<8x128xf32> -> vector<8x128xf32>
    %c0_64 = arith.constant 0 : index
    %c0_65 = arith.constant 0 : index
    %334 = vector.load %arg8[%c0_64, %c0_65] : memref<1x128xf32, #tpu.memory_space<vmem>>, vector<1x128xf32>
    %335 = vector.broadcast %334 : vector<1x128xf32> to vector<8x128xf32>
    %336 = arith.addf %333, %335 : vector<8x128xf32>
    %337 = arith.negf %336 : vector<8x128xf32>
    %338 = math.exp %337 : vector<8x128xf32>
    %cst_66 = arith.constant 1.000000e+00 : f32
    %339 = vector.broadcast %cst_66 : f32 to vector<8x128xf32>
    %340 = arith.addf %339, %338 : vector<8x128xf32>
    %341 = arith.divf %339, %340 : vector<8x128xf32>
    %c0_67 = arith.constant 0 : index
    %c0_68 = arith.constant 0 : index
    %342 = vector.load %arg9[%c0_67, %c0_68] : memref<8x128xf32, #tpu.memory_space<vmem>>, vector<8x128xf32>
    tpu.vector_store %arg9[%c0_67, %c0_68], %341 {strides = array<i32>} : memref<8x128xf32, #tpu.memory_space<vmem>>, vector<8x128xf32>,
    return
  }
}

</mosaic_0001>

<llo_original>
// kernel: tpu_custom_call.1
$region0: #{tpu_custom_call.1}
  #allocation0 [shape = 'u32[]', space=smem, size = 0x4, offset = 0x4, fixed_abs, tag = 'smem constant byte address 0x4 - core index']
  #allocation1 [shape = 'u32[144,128]{1,0:T(1,128)}', space=vmem, size = 0x12000, scoped, tag = 'internal scratch']
  #allocation2 [shape = 'f32[64,32]{1,0:T(8,128)}', space=vmem, size = 0x8000, scoped, tag = 'scratch operand']
  %s0 = inlined_call_operand.vmem [shape: bf16[64,16], index: 0, kind: input, shape index: {}]
  %s1 = inlined_call_operand.hbm [shape: bf16[16,128], index: 1, kind: input, shape index: {}]
  %s2 = inlined_call_operand.vmem [shape: bf16[32,128], index: 2, kind: input, shape index: {}]
  %s3 = inlined_call_operand.vmem [shape: f32[1,128], index: 3, kind: input, shape index: {}]
  %s4 = inlined_call_operand.vmem [shape: bf16[32,128], index: 4, kind: input, shape index: {}]
  %s5 = inlined_call_operand.vmem [shape: bf16[32,128], index: 5, kind: input, shape index: {}]
  %s6 = inlined_call_operand.vmem [shape: f32[1,128], index: 6, kind: input, shape index: {}]
  %s7 = inlined_call_operand.vmem [shape: bf16[32,128], index: 7, kind: input, shape index: {}]
  %s8 = inlined_call_operand.vmem [shape: f32[1,128], index: 8, kind: input, shape index: {}]
  %s9 = inlined_call_operand.hbm [shape: f32[8,128], index: 9, kind: output, shape index: {}]
  %s10 = sld [smem:[#allocation0]]
  $region50: #{tpu_custom_call.1} parent=0
    _
  %s12 = ssub.s32 1, %s10
  %s13 = scalar_select 0, %s12, %s10
  $region1: #{tpu_custom_call.1} parent=0
    #allocation3 [shape = 'u8[4096]{0}', space=vmem, size = 0x1000, scoped, tag = 'input window, operand 1, single buffered']
    #allocation4 [shape = 's32[1]{0}', space=sflag, size = 0x4, scoped, tag = 'scoped memory for tpu_custom_call.1']
    #allocation5 [shape = 's32[1]{0}', space=sflag, size = 0x4, scoped, tag = 'scoped memory for tpu_custom_call.1']
    #allocation6 [shape = 'u8[4096]{0}', space=vmem, size = 0x1000, scoped, tag = 'output window, operand 0, single buffered']
    %14 = vsyncpa [#allocation4], 0
    %15 = vsyncpa [#allocation5], 0
    // Predicated region
    $region2: #{tpu_custom_call.1} parent=1 // pred_check
      _
    $region3: #{tpu_custom_call.1} parent=1 // pred_check_branch
      %17 = sbr.rel (0) target = $region5
    $region4: #{tpu_custom_call.1} parent=1 // pred_region
      _
    $region5: #{tpu_custom_call.1} parent=1 // pred_fallthru
      _
    // Predicated region
    $region6: #{tpu_custom_call.1} parent=1 // pred_check
      _
    $region7: #{tpu_custom_call.1} parent=1 // pred_check_branch
      %19 = sbr.rel (0) target = $region9
    $region8: #{tpu_custom_call.1} parent=1 // pred_region
      %s21 = ssub.s32 128, 128
      %22 = vsyncadd [#allocation4], %s21
      %s23 = sshll.u32 [#allocation3], 4
      %s24 = int_to_ptr.vmem [resolvable:$true] %s23
      %29 = dma.hbm_to_vmem [thread:$0]  %s1, 128, %s24, [#allocation4], 64, 64, 4
    $region9: #{tpu_custom_call.1} parent=1 // pred_fallthru
      _
    // Predicated region
    $region10: #{tpu_custom_call.1} parent=1 // pred_check
      _
    $region11: #{tpu_custom_call.1} parent=1 // pred_check_branch
      %31 = sbr.rel (0) target = $region13
    $region12: #{tpu_custom_call.1} parent=1 // pred_region
      _
    $region13: #{tpu_custom_call.1} parent=1 // pred_fallthru
      _
    // Predicated region
    $region14: #{tpu_custom_call.1} parent=1 // pred_check
      _
    $region15: #{tpu_custom_call.1} parent=1 // pred_check_branch
      %33 = sbr.rel (0) target = $region17
    $region16: #{tpu_custom_call.1} parent=1 // pred_region
      _
    $region17: #{tpu_custom_call.1} parent=1 // pred_fallthru
      _
    // Predicated region
    $region18: #{tpu_custom_call.1} parent=1 // pred_check
      _
    $region19: #{tpu_custom_call.1} parent=1 // pred_check_branch
      %35 = sbr.rel (0) target = $region21
    $region20: #{tpu_custom_call.1} parent=1 // pred_region
      _
    $region21: #{tpu_custom_call.1} parent=1 // pred_fallthru
      _
    // Predicated region
    $region22: #{tpu_custom_call.1} parent=1 // pred_check
      _
    $region23: #{tpu_custom_call.1} parent=1 // pred_check_branch
      %37 = sbr.rel (0) target = $region25
    $region24: #{tpu_custom_call.1} parent=1 // pred_region
      _
    $region25: #{tpu_custom_call.1} parent=1 // pred_fallthru
      _
    // Predicated region
    $region26: #{tpu_custom_call.1} parent=1 // pred_check
      _
    $region27: #{tpu_custom_call.1} parent=1 // pred_check_branch
      %39 = sbr.rel (0) target = $region29
    $region28: #{tpu_custom_call.1} parent=1 // pred_region
      _
    $region29: #{tpu_custom_call.1} parent=1 // pred_fallthru
      _
    // Predicated region
    $region30: #{tpu_custom_call.1} parent=1 // pred_check
      _
    $region31: #{tpu_custom_call.1} parent=1 // pred_check_branch
      %41 = sbr.rel (0) target = $region33
    $region32: #{tpu_custom_call.1} parent=1 // pred_region
      _
    $region33: #{tpu_custom_call.1} parent=1 // pred_fallthru
      _
    // Predicated region
    $region34: #{tpu_custom_call.1} parent=1 // pred_check
      _
    $region35: #{tpu_custom_call.1} parent=1 // pred_check_branch
      %43 = sbr.rel (0) target = $region37
    $region36: #{tpu_custom_call.1} parent=1 // pred_region
      _
    $region37: #{tpu_custom_call.1} parent=1 // pred_fallthru
      _
    // Predicated region
    $region38: #{tpu_custom_call.1} parent=1 // pred_check
      _
    $region39: #{tpu_custom_call.1} parent=1 // pred_check_branch
      %45 = sbr.rel (0) target = $region41
    $region40: #{tpu_custom_call.1} parent=1 // pred_region
      %46 = dma.done [#allocation4], 128
    $region41: #{tpu_custom_call.1} parent=1 // pred_fallthru
      _
    %v48 = vld [vmem:[#allocation3] sm:$0xf]
    %v49 = vld [vmem:[#allocation3 + $0x4] sm:$0xf]
    %v50 = vld [vmem:[%s2] sm:$0xf]
    %v51 = vld [vmem:[%s2 + $0x4] sm:$0xf]
    %v52 = vld [vmem:[%s2 + $0x8] sm:$0xf]
    %v53 = vld [vmem:[%s2 + $0xc] sm:$0xf]
    %v54 = vld [vmem:[%s3] sm:$0x1]
    %v55 = vld [vmem:[%s0] sm:$0xf]
    %v56 = vld [vmem:[%s0 + $0x4] sm:$0xf]
    %v57 = vld [vmem:[%s0 + $0x8] sm:$0xf]
    %v58 = vld [vmem:[%s0 + $0xc] sm:$0xf]
    %v59 = vld [vmem:[%s0 + $0x10] sm:$0xf]
    %v60 = vld [vmem:[%s0 + $0x14] sm:$0xf]
    %v61 = vld [vmem:[%s0 + $0x18] sm:$0xf]
    %v62 = vld [vmem:[%s0 + $0x1c] sm:$0xf]
    %v64 = vlaneseq
    %v65 = vshrl.u32 %v64, 7
    %v66 = vsub.s32 0, %v65
    %v67 = vrot.slane %v54, %v66
    %v77 = vunpack.c.l.b16 %v55
    %v78 = vunpack.c.l.b16 %v56
    %v79 = vunpack.c.l.b16 %v57
    %v80 = vunpack.c.l.b16 %v58
    %v81 = vunpack.c.l.b16 %v59
    %v82 = vunpack.c.l.b16 %v60
    %v83 = vunpack.c.l.b16 %v61
    %v84 = vunpack.c.l.b16 %v62
    %v85 = vpack.c.b16 %v78, %v77
    %v86 = vpack.c.b16 %v80, %v79
    %v87 = vpack.c.b16 %v82, %v81
    %v88 = vpack.c.b16 %v84, %v83
    %v91 = vunpack.c.l.b16 %v48
    %v92 = vunpack.c.l.b16 %v49
    %v93 = vpack.c.b16 %v92, %v91
    %vm95 = vcmask 130048
    %v97 = vsel %vm95, %v85, 0
    %v100 = vsel %vm95, %v86, 0
    %v103 = vsel %vm95, %v87, 0
    %v106 = vsel %vm95, %v88, 0
    %108 = vmatprep.subr.bf16.mxu0 0
    %109 = vmatpush1.bf16.msra.mxu0 %v93
    %110 = vmatprep.subr.bf16.mxu0 0
    %111 = vmatpush1.bf16.msra.mxu0 0
    %112 = vmatprep.subr.bf16.mxu0 0
    %113 = vmatpush1.bf16.msra.mxu0 0
    %114 = vmatprep.subr.bf16.mxu0 0
    %115 = vmatpush1.bf16.msra.mxu0 0
    %116 = vmatprep.subr.bf16.mxu0 0
    %117 = vmatpush1.bf16.msra.mxu0 0
    %118 = vmatprep.subr.bf16.mxu0 0
    %119 = vmatpush1.bf16.msra.mxu0 0
    %120 = vmatprep.subr.bf16.mxu0 0
    %121 = vmatpush1.bf16.msra.mxu0 0
    %122 = vmatprep.subr.bf16.mxu0 0
    %123 = vmatpush1.bf16.msra.mxu0 0
    %124 = vmatprep.subr.bf16.mxu0 0
    %125 = vmatpush1.bf16.msra.mxu0 0
    %126 = vmatprep.subr.bf16.mxu0 0
    %127 = vmatpush1.bf16.msra.mxu0 0
    %128 = vmatprep.subr.bf16.mxu0 0
    %129 = vmatpush1.bf16.msra.mxu0 0
    %130 = vmatprep.subr.bf16.mxu0 0
    %131 = vmatpush1.bf16.msra.mxu0 0
    %132 = vmatprep.subr.bf16.mxu0 0
    %133 = vmatpush1.bf16.msra.mxu0 0
    %134 = vmatprep.subr.bf16.mxu0 0
    %135 = vmatpush1.bf16.msra.mxu0 0
    %136 = vmatprep.subr.bf16.mxu0 0
    %137 = vmatpush1.bf16.msra.mxu0 0
    %138 = vmatprep.subr.bf16.mxu0 0
    %139 = vmatpush1.bf16.msra.mxu0 0
    %140 = vmatprep.mubr.bf16.mxu0 0
    %141 = vmatmul.mubr.bf16.gmra.mrb[0].mxu0 %v97
    %v142 = vpop.f32.mrb[0].mxu0
    %v143 = vadd.f32 %v67, %v142
    %v144 = vpop.f32.mrb[0].mxu0
    %v145 = vpop.f32.mrb[0].mxu0
    %v146 = vadd.f32 %v67, %v145
    %v147 = vpop.f32.mrb[0].mxu0
    %148 = vmatprep.mubr.bf16.mxu0 0
    %149 = vmatmul.mubr.bf16.gmra.mrb[0].mxu0 %v100
    %v150 = vpop.f32.mrb[0].mxu0
    %v151 = vadd.f32 %v67, %v150
    %v152 = vpop.f32.mrb[0].mxu0
    %v153 = vpop.f32.mrb[0].mxu0
    %v154 = vadd.f32 %v67, %v153
    %v155 = vpop.f32.mrb[0].mxu0
    %156 = vmatprep.mubr.bf16.mxu0 0
    %157 = vmatmul.mubr.bf16.gmra.mrb[0].mxu0 %v103
    %v158 = vpop.f32.mrb[0].mxu0
    %v159 = vadd.f32 %v67, %v158
    %v160 = vpop.f32.mrb[0].mxu0
    %v161 = vpop.f32.mrb[0].mxu0
    %v162 = vadd.f32 %v67, %v161
    %v163 = vpop.f32.mrb[0].mxu0
    %164 = vmatprep.mubr.bf16.mxu0 0
    %165 = vmatmul.mubr.bf16.gmra.mrb[0].mxu0 %v106
    %v166 = vpop.f32.mrb[0].mxu0
    %v167 = vadd.f32 %v67, %v166
    %v168 = vpop.f32.mrb[0].mxu0
    %v169 = vpop.f32.mrb[0].mxu0
    %v170 = vadd.f32 %v67, %v169
    %v171 = vpop.f32.mrb[0].mxu0
    %172 = vdwg.mxu0
    %v177 = vunpack.c.l.b16 %v50
    %v178 = vunpack.c.l.b16 %v51
    %v179 = vunpack.c.l.b16 %v52
    %v180 = vunpack.c.l.b16 %v53
    %v181 = vpack.c.b16 %v178, %v177
    %v182 = vpack.c.b16 %v180, %v179
    %vm185 = vcmask 261120
    %v187 = vsel %vm185, 0, 0
    %189 = vmatprep.subr.bf16.mxu0 0
    %190 = vmatpush1.bf16.msra.mxu0 %v181
    %191 = vmatprep.subr.bf16.mxu0 0
    %192 = vmatpush1.bf16.msra.mxu0 %v182
    %193 = vmatprep.subr.bf16.mxu0 0
    %194 = vmatpush1.bf16.msra.mxu0 0
    %195 = vmatprep.subr.bf16.mxu0 0
    %196 = vmatpush1.bf16.msra.mxu0 0
    %197 = vmatprep.subr.bf16.mxu0 0
    %198 = vmatpush1.bf16.msra.mxu0 0
    %199 = vmatprep.subr.bf16.mxu0 0
    %200 = vmatpush1.bf16.msra.mxu0 0
    %201 = vmatprep.subr.bf16.mxu0 0
    %202 = vmatpush1.bf16.msra.mxu0 0
    %203 = vmatprep.subr.bf16.mxu0 0
    %204 = vmatpush1.bf16.msra.mxu0 0
    %205 = vmatprep.subr.bf16.mxu0 0
    %206 = vmatpush1.bf16.msra.mxu0 0
    %207 = vmatprep.subr.bf16.mxu0 0
    %208 = vmatpush1.bf16.msra.mxu0 0
    %209 = vmatprep.subr.bf16.mxu0 0
    %210 = vmatpush1.bf16.msra.mxu0 0
    %211 = vmatprep.subr.bf16.mxu0 0
    %212 = vmatpush1.bf16.msra.mxu0 0
    %213 = vmatprep.subr.bf16.mxu0 0
    %214 = vmatpush1.bf16.msra.mxu0 0
    %215 = vmatprep.subr.bf16.mxu0 0
    %216 = vmatpush1.bf16.msra.mxu0 0
    %217 = vmatprep.subr.bf16.mxu0 0
    %218 = vmatpush1.bf16.msra.mxu0 0
    %219 = vmatprep.subr.bf16.mxu0 0
    %220 = vmatpush1.bf16.msra.mxu0 0
    %221 = vmatprep.mubr.bf16.mxu0 0
    %222 = vmatmul.mubr.bf16.gmra.mrb[0].mxu0 %v187
    %v223 = vpop.f32.mrb[0].mxu0
    %v224 = vadd.f32 0.0, %v223
    %v225 = vpop.f32.mrb[0].mxu0
    %v226 = vpop.f32.mrb[0].mxu0
    %v227 = vpop.f32.mrb[0].mxu0
    %228 = vdwg.mxu0
    %v229 = vadd.f32 %v143, %v224
    %v230 = vxor.u32 %v229, 2147483648
    %v231 = vmul.f32 %v230, 1.442695
    %v232 = vpow.pop %v231
    %v233 = vadd.f32 %v232, 1.0
    %v234 = vrcp.pop %v233
    %v235 = vmul.f32 1.0, %v234
    %v236 = vtanh.pop %v229
    %v237 = vmul.f32 %v235, 0.0
    %239 = vrot.lane.b32.xlu0 %v236, 64
    %v240 = vpop.permute.xlu0 %239
    %v242 = vmul.f32 %v235, %v240
    %244 = vrot.lane.b32.xlu0 %v242, 32
    %v245 = vpop.permute.xlu0 %244
    %v247 = vadd.f32 %v237, %v245
    %v248 = vtanh.pop %v247
    %250 = vrot.lane.b32.xlu0 %v248, 64
    %v251 = vpop.permute.xlu0 %250
    %v253 = vmul.f32 %v235, %v251
    %255 = vrot.lane.b32.xlu0 %v253, 32
    %v256 = vpop.permute.xlu0 %255
    %258 = vst.msk [vmem:[#allocation2] sm:$0xff] %vm185, %v256
    %v259 = vpack.c.bf16 %v253, %v253
    %261 = vrot.lane.b32.xlu0 %v259, 32
    %v262 = vpop.permute.xlu0 %261
    %v264 = vsel %vm185, %v262, 0
    %266 = vmatprep.subr.bf16.mxu0 0
    %267 = vmatpush1.bf16.msra.mxu0 %v181
    %268 = vmatprep.subr.bf16.mxu0 0
    %269 = vmatpush1.bf16.msra.mxu0 %v182
    %270 = vmatprep.subr.bf16.mxu0 0
    %271 = vmatpush1.bf16.msra.mxu0 0
    %272 = vmatprep.subr.bf16.mxu0 0
    %273 = vmatpush1.bf16.msra.mxu0 0
    %274 = vmatprep.subr.bf16.mxu0 0
    %275 = vmatpush1.bf16.msra.mxu0 0
    %276 = vmatprep.subr.bf16.mxu0 0
    %277 = vmatpush1.bf16.msra.mxu0 0
    %278 = vmatprep.subr.bf16.mxu0 0
    %279 = vmatpush1.bf16.msra.mxu0 0
    %280 = vmatprep.subr.bf16.mxu0 0
    %281 = vmatpush1.bf16.msra.mxu0 0
    %282 = vmatprep.subr.bf16.mxu0 0
    %283 = vmatpush1.bf16.msra.mxu0 0
    %284 = vmatprep.subr.bf16.mxu0 0
    %285 = vmatpush1.bf16.msra.mxu0 0
    %286 = vmatprep.subr.bf16.mxu0 0
    %287 = vmatpush1.bf16.msra.mxu0 0
    %288 = vmatprep.subr.bf16.mxu0 0
    %289 = vmatpush1.bf16.msra.mxu0 0
    %290 = vmatprep.subr.bf16.mxu0 0
    %291 = vmatpush1.bf16.msra.mxu0 0
    %292 = vmatprep.subr.bf16.mxu0 0
    %293 = vmatpush1.bf16.msra.mxu0 0
    %294 = vmatprep.subr.bf16.mxu0 0
    %295 = vmatpush1.bf16.msra.mxu0 0
    %296 = vmatprep.subr.bf16.mxu0 0
    %297 = vmatpush1.bf16.msra.mxu0 0
    %298 = vmatprep.mubr.bf16.mxu0 0
    %299 = vmatmul.mubr.bf16.gmra.mrb[0].mxu0 %v264
    %v300 = vpop.f32.mrb[0].mxu0
    %v301 = vadd.f32 0.0, %v300
    %v302 = vpop.f32.mrb[0].mxu0
    %v303 = vpop.f32.mrb[0].mxu0
    %v304 = vpop.f32.mrb[0].mxu0
    %305 = vdwg.mxu0
    %v306 = vadd.f32 %v146, %v301
    %v307 = vxor.u32 %v306, 2147483648
    %v308 = vmul.f32 %v307, 1.442695
    %v309 = vpow.pop %v308
    %v310 = vadd.f32 %v309, 1.0
    %v311 = vrcp.pop %v310
    %v312 = vmul.f32 1.0, %v311
    %v313 = vtanh.pop %v306
    %v314 = vmul.f32 %v312, %v247
    %316 = vrot.lane.b32.xlu0 %v313, 64
    %v317 = vpop.permute.xlu0 %316
    %v319 = vmul.f32 %v312, %v317
    %321 = vrot.lane.b32.xlu0 %v319, 32
    %v322 = vpop.permute.xlu0 %321
    %v324 = vadd.f32 %v314, %v322
    %v325 = vtanh.pop %v324
    %327 = vrot.lane.b32.xlu0 %v325, 64
    %v328 = vpop.permute.xlu0 %327
    %v330 = vmul.f32 %v312, %v328
    %332 = vrot.lane.b32.xlu0 %v330, 32
    %v333 = vpop.permute.xlu0 %332
    %335 = vst.msk [vmem:[#allocation2 + $0x8] sm:$0xff] %vm185, %v333
    %v336 = vpack.c.bf16 %v330, %v330
    %338 = vrot.lane.b32.xlu0 %v336, 32
    %v339 = vpop.permute.xlu0 %338
    %v341 = vsel %vm185, %v339, 0
    %343 = vmatprep.subr.bf16.mxu0 0
    %344 = vmatpush1.bf16.msra.mxu0 %v181
    %345 = vmatprep.subr.bf16.mxu0 0
    %346 = vmatpush1.bf16.msra.mxu0 %v182
    %347 = vmatprep.subr.bf16.mxu0 0
    %348 = vmatpush1.bf16.msra.mxu0 0
    %349 = vmatprep.subr.bf16.mxu0 0
    %350 = vmatpush1.bf16.msra.mxu0 0
    %351 = vmatprep.subr.bf16.mxu0 0
    %352 = vmatpush1.bf16.msra.mxu0 0
    %353 = vmatprep.subr.bf16.mxu0 0
    %354 = vmatpush1.bf16.msra.mxu0 0
    %355 = vmatprep.subr.bf16.mxu0 0
    %356 = vmatpush1.bf16.msra.mxu0 0
    %357 = vmatprep.subr.bf16.mxu0 0
    %358 = vmatpush1.bf16.msra.mxu0 0
    %359 = vmatprep.subr.bf16.mxu0 0
    %360 = vmatpush1.bf16.msra.mxu0 0
    %361 = vmatprep.subr.bf16.mxu0 0
    %362 = vmatpush1.bf16.msra.mxu0 0
    %363 = vmatprep.subr.bf16.mxu0 0
    %364 = vmatpush1.bf16.msra.mxu0 0
    %365 = vmatprep.subr.bf16.mxu0 0
    %366 = vmatpush1.bf16.msra.mxu0 0
    %367 = vmatprep.subr.bf16.mxu0 0
    %368 = vmatpush1.bf16.msra.mxu0 0
    %369 = vmatprep.subr.bf16.mxu0 0
    %370 = vmatpush1.bf16.msra.mxu0 0
    %371 = vmatprep.subr.bf16.mxu0 0
    %372 = vmatpush1.bf16.msra.mxu0 0
    %373 = vmatprep.subr.bf16.mxu0 0
    %374 = vmatpush1.bf16.msra.mxu0 0
    %375 = vmatprep.mubr.bf16.mxu0 0
    %376 = vmatmul.mubr.bf16.gmra.mrb[0].mxu0 %v341
    %v377 = vpop.f32.mrb[0].mxu0
    %v378 = vadd.f32 0.0, %v377
    %v379 = vpop.f32.mrb[0].mxu0
    %v380 = vpop.f32.mrb[0].mxu0
    %v381 = vpop.f32.mrb[0].mxu0
    %382 = vdwg.mxu0
    %v383 = vadd.f32 %v151, %v378
    %v384 = vxor.u32 %v383, 2147483648
    %v385 = vmul.f32 %v384, 1.442695
    %v386 = vpow.pop %v385
    %v387 = vadd.f32 %v386, 1.0
    %v388 = vrcp.pop %v387
    %v389 = vmul.f32 1.0, %v388
    %v390 = vtanh.pop %v383
    %v391 = vmul.f32 %v389, %v324
    %393 = vrot.lane.b32.xlu0 %v390, 64
    %v394 = vpop.permute.xlu0 %393
    %v396 = vmul.f32 %v389, %v394
    %398 = vrot.lane.b32.xlu0 %v396, 32
    %v399 = vpop.permute.xlu0 %398
    %v401 = vadd.f32 %v391, %v399
    %v402 = vtanh.pop %v401
    %404 = vrot.lane.b32.xlu0 %v402, 64
    %v405 = vpop.permute.xlu0 %404
    %v407 = vmul.f32 %v389, %v405
    %409 = vrot.lane.b32.xlu0 %v407, 32
    %v410 = vpop.permute.xlu0 %409
    %412 = vst.msk [vmem:[#allocation2 + $0x10] sm:$0xff] %vm185, %v410
    %v413 = vpack.c.bf16 %v407, %v407
    %415 = vrot.lane.b32.xlu0 %v413, 32
    %v416 = vpop.permute.xlu0 %415
    %v418 = vsel %vm185, %v416, 0
    %420 = vmatprep.subr.bf16.mxu0 0
    %421 = vmatpush1.bf16.msra.mxu0 %v181
    %422 = vmatprep.subr.bf16.mxu0 0
    %423 = vmatpush1.bf16.msra.mxu0 %v182
    %424 = vmatprep.subr.bf16.mxu0 0
    %425 = vmatpush1.bf16.msra.mxu0 0
    %426 = vmatprep.subr.bf16.mxu0 0
    %427 = vmatpush1.bf16.msra.mxu0 0
    %428 = vmatprep.subr.bf16.mxu0 0
    %429 = vmatpush1.bf16.msra.mxu0 0
    %430 = vmatprep.subr.bf16.mxu0 0
    %431 = vmatpush1.bf16.msra.mxu0 0
    %432 = vmatprep.subr.bf16.mxu0 0
    %433 = vmatpush1.bf16.msra.mxu0 0
    %434 = vmatprep.subr.bf16.mxu0 0
    %435 = vmatpush1.bf16.msra.mxu0 0
    %436 = vmatprep.subr.bf16.mxu0 0
    %437 = vmatpush1.bf16.msra.mxu0 0
    %438 = vmatprep.subr.bf16.mxu0 0
    %439 = vmatpush1.bf16.msra.mxu0 0
    %440 = vmatprep.subr.bf16.mxu0 0
    %441 = vmatpush1.bf16.msra.mxu0 0
    %442 = vmatprep.subr.bf16.mxu0 0
    %443 = vmatpush1.bf16.msra.mxu0 0
    %444 = vmatprep.subr.bf16.mxu0 0
    %445 = vmatpush1.bf16.msra.mxu0 0
    %446 = vmatprep.subr.bf16.mxu0 0
    %447 = vmatpush1.bf16.msra.mxu0 0
    %448 = vmatprep.subr.bf16.mxu0 0
    %449 = vmatpush1.bf16.msra.mxu0 0
    %450 = vmatprep.subr.bf16.mxu0 0
    %451 = vmatpush1.bf16.msra.mxu0 0
    %452 = vmatprep.mubr.bf16.mxu0 0
    %453 = vmatmul.mubr.bf16.gmra.mrb[0].mxu0 %v418
    %v454 = vpop.f32.mrb[0].mxu0
    %v455 = vadd.f32 0.0, %v454
    %v456 = vpop.f32.mrb[0].mxu0
    %v457 = vpop.f32.mrb[0].mxu0
    %v458 = vpop.f32.mrb[0].mxu0
    %459 = vdwg.mxu0
    %v460 = vadd.f32 %v154, %v455
    %v461 = vxor.u32 %v460, 2147483648
    %v462 = vmul.f32 %v461, 1.442695
    %v463 = vpow.pop %v462
    %v464 = vadd.f32 %v463, 1.0
    %v465 = vrcp.pop %v464
    %v466 = vmul.f32 1.0, %v465
    %v467 = vtanh.pop %v460
    %v468 = vmul.f32 %v466, %v401
    %470 = vrot.lane.b32.xlu0 %v467, 64
    %v471 = vpop.permute.xlu0 %470
    %v473 = vmul.f32 %v466, %v471
    %475 = vrot.lane.b32.xlu0 %v473, 32
    %v476 = vpop.permute.xlu0 %475
    %v478 = vadd.f32 %v468, %v476
    %v479 = vtanh.pop %v478
    %481 = vrot.lane.b32.xlu0 %v479, 64
    %v482 = vpop.permute.xlu0 %481
    %v484 = vmul.f32 %v466, %v482
    %486 = vrot.lane.b32.xlu0 %v484, 32
    %v487 = vpop.permute.xlu0 %486
    %489 = vst.msk [vmem:[#allocation2 + $0x18] sm:$0xff] %vm185, %v487
    %v490 = vpack.c.bf16 %v484, %v484
    %492 = vrot.lane.b32.xlu0 %v490, 32
    %v493 = vpop.permute.xlu0 %492
    %v495 = vsel %vm185, %v493, 0
    %497 = vmatprep.subr.bf16.mxu0 0
    %498 = vmatpush1.bf16.msra.mxu0 %v181
    %499 = vmatprep.subr.bf16.mxu0 0
    %500 = vmatpush1.bf16.msra.mxu0 %v182
    %501 = vmatprep.subr.bf16.mxu0 0
    %502 = vmatpush1.bf16.msra.mxu0 0
    %503 = vmatprep.subr.bf16.mxu0 0
    %504 = vmatpush1.bf16.msra.mxu0 0
    %505 = vmatprep.subr.bf16.mxu0 0
    %506 = vmatpush1.bf16.msra.mxu0 0
    %507 = vmatprep.subr.bf16.mxu0 0
    %508 = vmatpush1.bf16.msra.mxu0 0
    %509 = vmatprep.subr.bf16.mxu0 0
    %510 = vmatpush1.bf16.msra.mxu0 0
    %511 = vmatprep.subr.bf16.mxu0 0
    %512 = vmatpush1.bf16.msra.mxu0 0
    %513 = vmatprep.subr.bf16.mxu0 0
    %514 = vmatpush1.bf16.msra.mxu0 0
    %515 = vmatprep.subr.bf16.mxu0 0
    %516 = vmatpush1.bf16.msra.mxu0 0
    %517 = vmatprep.subr.bf16.mxu0 0
    %518 = vmatpush1.bf16.msra.mxu0 0
    %519 = vmatprep.subr.bf16.mxu0 0
    %520 = vmatpush1.bf16.msra.mxu0 0
    %521 = vmatprep.subr.bf16.mxu0 0
    %522 = vmatpush1.bf16.msra.mxu0 0
    %523 = vmatprep.subr.bf16.mxu0 0
    %524 = vmatpush1.bf16.msra.mxu0 0
    %525 = vmatprep.subr.bf16.mxu0 0
    %526 = vmatpush1.bf16.msra.mxu0 0
    %527 = vmatprep.subr.bf16.mxu0 0
    %528 = vmatpush1.bf16.msra.mxu0 0
    %529 = vmatprep.mubr.bf16.mxu0 0
    %530 = vmatmul.mubr.bf16.gmra.mrb[0].mxu0 %v495
    %v531 = vpop.f32.mrb[0].mxu0
    %v532 = vadd.f32 0.0, %v531
    %v533 = vpop.f32.mrb[0].mxu0
    %v534 = vpop.f32.mrb[0].mxu0
    %v535 = vpop.f32.mrb[0].mxu0
    %536 = vdwg.mxu0
    %v537 = vadd.f32 %v159, %v532
    %v538 = vxor.u32 %v537, 2147483648
    %v539 = vmul.f32 %v538, 1.442695
    %v540 = vpow.pop %v539
    %v541 = vadd.f32 %v540, 1.0
    %v542 = vrcp.pop %v541
    %v543 = vmul.f32 1.0, %v542
    %v544 = vtanh.pop %v537
    %v545 = vmul.f32 %v543, %v478
    %547 = vrot.lane.b32.xlu0 %v544, 64
    %v548 = vpop.permute.xlu0 %547
    %v550 = vmul.f32 %v543, %v548
    %552 = vrot.lane.b32.xlu0 %v550, 32
    %v553 = vpop.permute.xlu0 %552
    %v555 = vadd.f32 %v545, %v553
    %v556 = vtanh.pop %v555
    %558 = vrot.lane.b32.xlu0 %v556, 64
    %v559 = vpop.permute.xlu0 %558
    %v561 = vmul.f32 %v543, %v559
    %563 = vrot.lane.b32.xlu0 %v561, 32
    %v564 = vpop.permute.xlu0 %563
    %566 = vst.msk [vmem:[#allocation2 + $0x20] sm:$0xff] %vm185, %v564
    %v567 = vpack.c.bf16 %v561, %v561
    %569 = vrot.lane.b32.xlu0 %v567, 32
    %v570 = vpop.permute.xlu0 %569
    %v572 = vsel %vm185, %v570, 0
    %574 = vmatprep.subr.bf16.mxu0 0
    %575 = vmatpush1.bf16.msra.mxu0 %v181
    %576 = vmatprep.subr.bf16.mxu0 0
    %577 = vmatpush1.bf16.msra.mxu0 %v182
    %578 = vmatprep.subr.bf16.mxu0 0
    %579 = vmatpush1.bf16.msra.mxu0 0
    %580 = vmatprep.subr.bf16.mxu0 0
    %581 = vmatpush1.bf16.msra.mxu0 0
    %582 = vmatprep.subr.bf16.mxu0 0
    %583 = vmatpush1.bf16.msra.mxu0 0
    %584 = vmatprep.subr.bf16.mxu0 0
    %585 = vmatpush1.bf16.msra.mxu0 0
    %586 = vmatprep.subr.bf16.mxu0 0
    %587 = vmatpush1.bf16.msra.mxu0 0
    %588 = vmatprep.subr.bf16.mxu0 0
    %589 = vmatpush1.bf16.msra.mxu0 0
    %590 = vmatprep.subr.bf16.mxu0 0
    %591 = vmatpush1.bf16.msra.mxu0 0
    %592 = vmatprep.subr.bf16.mxu0 0
    %593 = vmatpush1.bf16.msra.mxu0 0
    %594 = vmatprep.subr.bf16.mxu0 0
    %595 = vmatpush1.bf16.msra.mxu0 0
    %596 = vmatprep.subr.bf16.mxu0 0
    %597 = vmatpush1.bf16.msra.mxu0 0
    %598 = vmatprep.subr.bf16.mxu0 0
    %599 = vmatpush1.bf16.msra.mxu0 0
    %600 = vmatprep.subr.bf16.mxu0 0
    %601 = vmatpush1.bf16.msra.mxu0 0
    %602 = vmatprep.subr.bf16.mxu0 0
    %603 = vmatpush1.bf16.msra.mxu0 0
    %604 = vmatprep.subr.bf16.mxu0 0
    %605 = vmatpush1.bf16.msra.mxu0 0
    %606 = vmatprep.mubr.bf16.mxu0 0
    %607 = vmatmul.mubr.bf16.gmra.mrb[0].mxu0 %v572
    %v608 = vpop.f32.mrb[0].mxu0
    %v609 = vadd.f32 0.0, %v608
    %v610 = vpop.f32.mrb[0].mxu0
    %v611 = vpop.f32.mrb[0].mxu0
    %v612 = vpop.f32.mrb[0].mxu0
    %613 = vdwg.mxu0
    %v614 = vadd.f32 %v162, %v609
    %v615 = vxor.u32 %v614, 2147483648
    %v616 = vmul.f32 %v615, 1.442695
    %v617 = vpow.pop %v616
    %v618 = vadd.f32 %v617, 1.0
    %v619 = vrcp.pop %v618
    %v620 = vmul.f32 1.0, %v619
    %v621 = vtanh.pop %v614
    %v622 = vmul.f32 %v620, %v555
    %624 = vrot.lane.b32.xlu0 %v621, 64
    %v625 = vpop.permute.xlu0 %624
    %v627 = vmul.f32 %v620, %v625
    %629 = vrot.lane.b32.xlu0 %v627, 32
    %v630 = vpop.permute.xlu0 %629
    %v632 = vadd.f32 %v622, %v630
    %v633 = vtanh.pop %v632
    %635 = vrot.lane.b32.xlu0 %v633, 64
    %v636 = vpop.permute.xlu0 %635
    %v638 = vmul.f32 %v620, %v636
    %640 = vrot.lane.b32.xlu0 %v638, 32
    %v641 = vpop.permute.xlu0 %640
    %643 = vst.msk [vmem:[#allocation2 + $0x28] sm:$0xff] %vm185, %v641
    %v644 = vpack.c.bf16 %v638, %v638
    %646 = vrot.lane.b32.xlu0 %v644, 32
    %v647 = vpop.permute.xlu0 %646
    %v649 = vsel %vm185, %v647, 0
    %651 = vmatprep.subr.bf16.mxu0 0
    %652 = vmatpush1.bf16.msra.mxu0 %v181
    %653 = vmatprep.subr.bf16.mxu0 0
    %654 = vmatpush1.bf16.msra.mxu0 %v182
    %655 = vmatprep.subr.bf16.mxu0 0
    %656 = vmatpush1.bf16.msra.mxu0 0
    %657 = vmatprep.subr.bf16.mxu0 0
    %658 = vmatpush1.bf16.msra.mxu0 0
    %659 = vmatprep.subr.bf16.mxu0 0
    %660 = vmatpush1.bf16.msra.mxu0 0
    %661 = vmatprep.subr.bf16.mxu0 0
    %662 = vmatpush1.bf16.msra.mxu0 0
    %663 = vmatprep.subr.bf16.mxu0 0
    %664 = vmatpush1.bf16.msra.mxu0 0
    %665 = vmatprep.subr.bf16.mxu0 0
    %666 = vmatpush1.bf16.msra.mxu0 0
    %667 = vmatprep.subr.bf16.mxu0 0
    %668 = vmatpush1.bf16.msra.mxu0 0
    %669 = vmatprep.subr.bf16.mxu0 0
    %670 = vmatpush1.bf16.msra.mxu0 0
    %671 = vmatprep.subr.bf16.mxu0 0
    %672 = vmatpush1.bf16.msra.mxu0 0
    %673 = vmatprep.subr.bf16.mxu0 0
    %674 = vmatpush1.bf16.msra.mxu0 0
    %675 = vmatprep.subr.bf16.mxu0 0
    %676 = vmatpush1.bf16.msra.mxu0 0
    %677 = vmatprep.subr.bf16.mxu0 0
    %678 = vmatpush1.bf16.msra.mxu0 0
    %679 = vmatprep.subr.bf16.mxu0 0
    %680 = vmatpush1.bf16.msra.mxu0 0
    %681 = vmatprep.subr.bf16.mxu0 0
    %682 = vmatpush1.bf16.msra.mxu0 0
    %683 = vmatprep.mubr.bf16.mxu0 0
    %684 = vmatmul.mubr.bf16.gmra.mrb[0].mxu0 %v649
    %v685 = vpop.f32.mrb[0].mxu0
    %v686 = vadd.f32 0.0, %v685
    %v687 = vpop.f32.mrb[0].mxu0
    %v688 = vpop.f32.mrb[0].mxu0
    %v689 = vpop.f32.mrb[0].mxu0
    %690 = vdwg.mxu0
    %v691 = vadd.f32 %v167, %v686
    %v692 = vxor.u32 %v691, 2147483648
    %v693 = vmul.f32 %v692, 1.442695
    %v694 = vpow.pop %v693
    %v695 = vadd.f32 %v694, 1.0
    %v696 = vrcp.pop %v695
    %v697 = vmul.f32 1.0, %v696
    %v698 = vtanh.pop %v691
    %v699 = vmul.f32 %v697, %v632
    %701 = vrot.lane.b32.xlu0 %v698, 64
    %v702 = vpop.permute.xlu0 %701
    %v704 = vmul.f32 %v697, %v702
    %706 = vrot.lane.b32.xlu0 %v704, 32
    %v707 = vpop.permute.xlu0 %706
    %v709 = vadd.f32 %v699, %v707
    %v710 = vtanh.pop %v709
    %712 = vrot.lane.b32.xlu0 %v710, 64
    %v713 = vpop.permute.xlu0 %712
    %v715 = vmul.f32 %v697, %v713
    %717 = vrot.lane.b32.xlu0 %v715, 32
    %v718 = vpop.permute.xlu0 %717
    %720 = vst.msk [vmem:[#allocation2 + $0x30] sm:$0xff] %vm185, %v718
    %v721 = vpack.c.bf16 %v715, %v715
    %723 = vrot.lane.b32.xlu0 %v721, 32
    %v724 = vpop.permute.xlu0 %723
    %v726 = vsel %vm185, %v724, 0
    %728 = vmatprep.subr.bf16.mxu0 0
    %729 = vmatpush1.bf16.msra.mxu0 %v181
    %730 = vmatprep.subr.bf16.mxu0 0
    %731 = vmatpush1.bf16.msra.mxu0 %v182
    %732 = vmatprep.subr.bf16.mxu0 0
    %733 = vmatpush1.bf16.msra.mxu0 0
    %734 = vmatprep.subr.bf16.mxu0 0
    %735 = vmatpush1.bf16.msra.mxu0 0
    %736 = vmatprep.subr.bf16.mxu0 0
    %737 = vmatpush1.bf16.msra.mxu0 0
    %738 = vmatprep.subr.bf16.mxu0 0
    %739 = vmatpush1.bf16.msra.mxu0 0
    %740 = vmatprep.subr.bf16.mxu0 0
    %741 = vmatpush1.bf16.msra.mxu0 0
    %742 = vmatprep.subr.bf16.mxu0 0
    %743 = vmatpush1.bf16.msra.mxu0 0
    %744 = vmatprep.subr.bf16.mxu0 0
    %745 = vmatpush1.bf16.msra.mxu0 0
    %746 = vmatprep.subr.bf16.mxu0 0
    %747 = vmatpush1.bf16.msra.mxu0 0
    %748 = vmatprep.subr.bf16.mxu0 0
    %749 = vmatpush1.bf16.msra.mxu0 0
    %750 = vmatprep.subr.bf16.mxu0 0
    %751 = vmatpush1.bf16.msra.mxu0 0
    %752 = vmatprep.subr.bf16.mxu0 0
    %753 = vmatpush1.bf16.msra.mxu0 0
    %754 = vmatprep.subr.bf16.mxu0 0
    %755 = vmatpush1.bf16.msra.mxu0 0
    %756 = vmatprep.subr.bf16.mxu0 0
    %757 = vmatpush1.bf16.msra.mxu0 0
    %758 = vmatprep.subr.bf16.mxu0 0
    %759 = vmatpush1.bf16.msra.mxu0 0
    %760 = vmatprep.mubr.bf16.mxu0 0
    %761 = vmatmul.mubr.bf16.gmra.mrb[0].mxu0 %v726
    %v762 = vpop.f32.mrb[0].mxu0
    %v763 = vadd.f32 0.0, %v762
    %v764 = vpop.f32.mrb[0].mxu0
    %v765 = vpop.f32.mrb[0].mxu0
    %v766 = vpop.f32.mrb[0].mxu0
    %767 = vdwg.mxu0
    %v768 = vadd.f32 %v170, %v763
    %v769 = vxor.u32 %v768, 2147483648
    %v770 = vmul.f32 %v769, 1.442695
    %v771 = vpow.pop %v770
    %v772 = vadd.f32 %v771, 1.0
    %v773 = vrcp.pop %v772
    %v774 = vmul.f32 1.0, %v773
    %v775 = vtanh.pop %v768
    %v776 = vmul.f32 %v774, %v709
    %778 = vrot.lane.b32.xlu0 %v775, 64
    %v779 = vpop.permute.xlu0 %778
    %v781 = vmul.f32 %v774, %v779
    %783 = vrot.lane.b32.xlu0 %v781, 32
    %v784 = vpop.permute.xlu0 %783
    %v786 = vadd.f32 %v776, %v784
    %v787 = vtanh.pop %v786
    %789 = vrot.lane.b32.xlu0 %v787, 64
    %v790 = vpop.permute.xlu0 %789
    %v792 = vmul.f32 %v774, %v790
    %794 = vrot.lane.b32.xlu0 %v792, 32
    %v795 = vpop.permute.xlu0 %794
    %797 = vst.msk [vmem:[#allocation2 + $0x38] sm:$0xff] %vm185, %v795
    %v798 = vld [vmem:[%s4] sm:$0xf]
    %v799 = vld [vmem:[%s4 + $0x4] sm:$0xf]
    %v800 = vld [vmem:[%s4 + $0x8] sm:$0xf]
    %v801 = vld [vmem:[%s4 + $0xc] sm:$0xf]
    %v802 = vld [vmem:[%s5] sm:$0xf]
    %v803 = vld [vmem:[%s5 + $0x4] sm:$0xf]
    %v804 = vld [vmem:[%s5 + $0x8] sm:$0xf]
    %v805 = vld [vmem:[%s5 + $0xc] sm:$0xf]
    %v806 = vld [vmem:[%s6] sm:$0x1]
    %v807 = vld [vmem:[#allocation2] sm:$0xff]
    %v808 = vld [vmem:[#allocation2 + $0x8] sm:$0xff]
    %v809 = vld [vmem:[#allocation2 + $0x10] sm:$0xff]
    %v810 = vld [vmem:[#allocation2 + $0x18] sm:$0xff]
    %v811 = vld [vmem:[#allocation2 + $0x20] sm:$0xff]
    %v812 = vld [vmem:[#allocation2 + $0x28] sm:$0xff]
    %v813 = vld [vmem:[#allocation2 + $0x30] sm:$0xff]
    %v814 = vld [vmem:[#allocation2 + $0x38] sm:$0xff]
    %v815 = vpack.c.bf16 %v808, %v807
    %v816 = vpack.c.bf16 %v810, %v809
    %v817 = vpack.c.bf16 %v812, %v811
    %v818 = vpack.c.bf16 %v814, %v813
    %v820 = vlaneseq
    %v821 = vshrl.u32 %v820, 7
    %v822 = vsub.s32 0, %v821
    %v823 = vrot.slane %v806, %v822
    %v829 = vunpack.c.l.b16 %v798
    %v830 = vunpack.c.l.b16 %v799
    %v831 = vunpack.c.l.b16 %v800
    %v832 = vunpack.c.l.b16 %v801
    %v833 = vpack.c.b16 %v830, %v829
    %v834 = vpack.c.b16 %v832, %v831
    %v838 = vsel %vm185, %v815, 0
    %v841 = vsel %vm185, %v816, 0
    %v844 = vsel %vm185, %v817, 0
    %v847 = vsel %vm185, %v818, 0
    %849 = vmatprep.subr.bf16.mxu0 0
    %850 = vmatpush1.bf16.msra.mxu0 %v833
    %851 = vmatprep.subr.bf16.mxu0 0
    %852 = vmatpush1.bf16.msra.mxu0 %v834
    %853 = vmatprep.subr.bf16.mxu0 0
    %854 = vmatpush1.bf16.msra.mxu0 0
    %855 = vmatprep.subr.bf16.mxu0 0
    %856 = vmatpush1.bf16.msra.mxu0 0
    %857 = vmatprep.subr.bf16.mxu0 0
    %858 = vmatpush1.bf16.msra.mxu0 0
    %859 = vmatprep.subr.bf16.mxu0 0
    %860 = vmatpush1.bf16.msra.mxu0 0
    %861 = vmatprep.subr.bf16.mxu0 0
    %862 = vmatpush1.bf16.msra.mxu0 0
    %863 = vmatprep.subr.bf16.mxu0 0
    %864 = vmatpush1.bf16.msra.mxu0 0
    %865 = vmatprep.subr.bf16.mxu0 0
    %866 = vmatpush1.bf16.msra.mxu0 0
    %867 = vmatprep.subr.bf16.mxu0 0
    %868 = vmatpush1.bf16.msra.mxu0 0
    %869 = vmatprep.subr.bf16.mxu0 0
    %870 = vmatpush1.bf16.msra.mxu0 0
    %871 = vmatprep.subr.bf16.mxu0 0
    %872 = vmatpush1.bf16.msra.mxu0 0
    %873 = vmatprep.subr.bf16.mxu0 0
    %874 = vmatpush1.bf16.msra.mxu0 0
    %875 = vmatprep.subr.bf16.mxu0 0
    %876 = vmatpush1.bf16.msra.mxu0 0
    %877 = vmatprep.subr.bf16.mxu0 0
    %878 = vmatpush1.bf16.msra.mxu0 0
    %879 = vmatprep.subr.bf16.mxu0 0
    %880 = vmatpush1.bf16.msra.mxu0 0
    %881 = vmatprep.mubr.bf16.mxu0 0
    %882 = vmatmul.mubr.bf16.gmra.mrb[0].mxu0 %v838
    %v883 = vpop.f32.mrb[0].mxu0
    %v884 = vadd.f32 %v823, %v883
    %v885 = vpop.f32.mrb[0].mxu0
    %v886 = vpop.f32.mrb[0].mxu0
    %v887 = vadd.f32 %v823, %v886
    %v888 = vpop.f32.mrb[0].mxu0
    %889 = vmatprep.mubr.bf16.mxu0 0
    %890 = vmatmul.mubr.bf16.gmra.mrb[0].mxu0 %v841
    %v891 = vpop.f32.mrb[0].mxu0
    %v892 = vadd.f32 %v823, %v891
    %v893 = vpop.f32.mrb[0].mxu0
    %v894 = vpop.f32.mrb[0].mxu0
    %v895 = vadd.f32 %v823, %v894
    %v896 = vpop.f32.mrb[0].mxu0
    %897 = vmatprep.mubr.bf16.mxu0 0
    %898 = vmatmul.mubr.bf16.gmra.mrb[0].mxu0 %v844
    %v899 = vpop.f32.mrb[0].mxu0
    %v900 = vadd.f32 %v823, %v899
    %v901 = vpop.f32.mrb[0].mxu0
    %v902 = vpop.f32.mrb[0].mxu0
    %v903 = vadd.f32 %v823, %v902
    %v904 = vpop.f32.mrb[0].mxu0
    %905 = vmatprep.mubr.bf16.mxu0 0
    %906 = vmatmul.mubr.bf16.gmra.mrb[0].mxu0 %v847
    %v907 = vpop.f32.mrb[0].mxu0
    %v908 = vadd.f32 %v823, %v907
    %v909 = vpop.f32.mrb[0].mxu0
    %v910 = vpop.f32.mrb[0].mxu0
    %v911 = vadd.f32 %v823, %v910
    %v912 = vpop.f32.mrb[0].mxu0
    %913 = vdwg.mxu0
    %v918 = vunpack.c.l.b16 %v802
    %v919 = vunpack.c.l.b16 %v803
    %v920 = vunpack.c.l.b16 %v804
    %v921 = vunpack.c.l.b16 %v805
    %v922 = vpack.c.b16 %v919, %v918
    %v923 = vpack.c.b16 %v921, %v920
    %926 = vmatprep.subr.bf16.mxu0 0
    %927 = vmatpush1.bf16.msra.mxu0 %v922
    %928 = vmatprep.subr.bf16.mxu0 0
    %929 = vmatpush1.bf16.msra.mxu0 %v923
    %930 = vmatprep.subr.bf16.mxu0 0
    %931 = vmatpush1.bf16.msra.mxu0 0
    %932 = vmatprep.subr.bf16.mxu0 0
    %933 = vmatpush1.bf16.msra.mxu0 0
    %934 = vmatprep.subr.bf16.mxu0 0
    %935 = vmatpush1.bf16.msra.mxu0 0
    %936 = vmatprep.subr.bf16.mxu0 0
    %937 = vmatpush1.bf16.msra.mxu0 0
    %938 = vmatprep.subr.bf16.mxu0 0
    %939 = vmatpush1.bf16.msra.mxu0 0
    %940 = vmatprep.subr.bf16.mxu0 0
    %941 = vmatpush1.bf16.msra.mxu0 0
    %942 = vmatprep.subr.bf16.mxu0 0
    %943 = vmatpush1.bf16.msra.mxu0 0
    %944 = vmatprep.subr.bf16.mxu0 0
    %945 = vmatpush1.bf16.msra.mxu0 0
    %946 = vmatprep.subr.bf16.mxu0 0
    %947 = vmatpush1.bf16.msra.mxu0 0
    %948 = vmatprep.subr.bf16.mxu0 0
    %949 = vmatpush1.bf16.msra.mxu0 0
    %950 = vmatprep.subr.bf16.mxu0 0
    %951 = vmatpush1.bf16.msra.mxu0 0
    %952 = vmatprep.subr.bf16.mxu0 0
    %953 = vmatpush1.bf16.msra.mxu0 0
    %954 = vmatprep.subr.bf16.mxu0 0
    %955 = vmatpush1.bf16.msra.mxu0 0
    %956 = vmatprep.subr.bf16.mxu0 0
    %957 = vmatpush1.bf16.msra.mxu0 0
    %958 = vmatprep.mubr.bf16.mxu0 0
    %959 = vmatmul.mubr.bf16.gmra.mrb[0].mxu0 %v187
    %v960 = vpop.f32.mrb[0].mxu0
    %v961 = vadd.f32 0.0, %v960
    %v962 = vpop.f32.mrb[0].mxu0
    %v963 = vpop.f32.mrb[0].mxu0
    %v964 = vpop.f32.mrb[0].mxu0
    %965 = vdwg.mxu0
    %v966 = vadd.f32 %v884, %v961
    %v967 = vxor.u32 %v966, 2147483648
    %v968 = vmul.f32 %v967, 1.442695
    %v969 = vpow.pop %v968
    %v970 = vadd.f32 %v969, 1.0
    %v971 = vrcp.pop %v970
    %v972 = vmul.f32 1.0, %v971
    %v973 = vtanh.pop %v966
    %v974 = vmul.f32 %v972, 0.0
    %976 = vrot.lane.b32.xlu0 %v973, 64
    %v977 = vpop.permute.xlu0 %976
    %v979 = vmul.f32 %v972, %v977
    %981 = vrot.lane.b32.xlu0 %v979, 32
    %v982 = vpop.permute.xlu0 %981
    %v984 = vadd.f32 %v974, %v982
    %v985 = vtanh.pop %v984
    %987 = vrot.lane.b32.xlu0 %v985, 64
    %v988 = vpop.permute.xlu0 %987
    %v990 = vmul.f32 %v972, %v988
    %v991 = vpack.c.bf16 %v990, %v990
    %993 = vrot.lane.b32.xlu0 %v991, 32
    %v994 = vpop.permute.xlu0 %993
    %v996 = vsel %vm185, %v994, 0
    %998 = vmatprep.subr.bf16.mxu0 0
    %999 = vmatpush1.bf16.msra.mxu0 %v922
    %1000 = vmatprep.subr.bf16.mxu0 0
    %1001 = vmatpush1.bf16.msra.mxu0 %v923
    %1002 = vmatprep.subr.bf16.mxu0 0
    %1003 = vmatpush1.bf16.msra.mxu0 0
    %1004 = vmatprep.subr.bf16.mxu0 0
    %1005 = vmatpush1.bf16.msra.mxu0 0
    %1006 = vmatprep.subr.bf16.mxu0 0
    %1007 = vmatpush1.bf16.msra.mxu0 0
    %1008 = vmatprep.subr.bf16.mxu0 0
    %1009 = vmatpush1.bf16.msra.mxu0 0
    %1010 = vmatprep.subr.bf16.mxu0 0
    %1011 = vmatpush1.bf16.msra.mxu0 0
    %1012 = vmatprep.subr.bf16.mxu0 0
    %1013 = vmatpush1.bf16.msra.mxu0 0
    %1014 = vmatprep.subr.bf16.mxu0 0
    %1015 = vmatpush1.bf16.msra.mxu0 0
    %1016 = vmatprep.subr.bf16.mxu0 0
    %1017 = vmatpush1.bf16.msra.mxu0 0
    %1018 = vmatprep.subr.bf16.mxu0 0
    %1019 = vmatpush1.bf16.msra.mxu0 0
    %1020 = vmatprep.subr.bf16.mxu0 0
    %1021 = vmatpush1.bf16.msra.mxu0 0
    %1022 = vmatprep.subr.bf16.mxu0 0
    %1023 = vmatpush1.bf16.msra.mxu0 0
    %1024 = vmatprep.subr.bf16.mxu0 0
    %1025 = vmatpush1.bf16.msra.mxu0 0
    %1026 = vmatprep.subr.bf16.mxu0 0
    %1027 = vmatpush1.bf16.msra.mxu0 0
    %1028 = vmatprep.subr.bf16.mxu0 0
    %1029 = vmatpush1.bf16.msra.mxu0 0
    %1030 = vmatprep.mubr.bf16.mxu0 0
    %1031 = vmatmul.mubr.bf16.gmra.mrb[0].mxu0 %v996
    %v1032 = vpop.f32.mrb[0].mxu0
    %v1033 = vadd.f32 0.0, %v1032
    %v1034 = vpop.f32.mrb[0].mxu0
    %v1035 = vpop.f32.mrb[0].mxu0
    %v1036 = vpop.f32.mrb[0].mxu0
    %1037 = vdwg.mxu0
    %v1038 = vadd.f32 %v887, %v1033
    %v1039 = vxor.u32 %v1038, 2147483648
    %v1040 = vmul.f32 %v1039, 1.442695
    %v1041 = vpow.pop %v1040
    %v1042 = vadd.f32 %v1041, 1.0
    %v1043 = vrcp.pop %v1042
    %v1044 = vmul.f32 1.0, %v1043
    %v1045 = vtanh.pop %v1038
    %v1046 = vmul.f32 %v1044, %v984
    %1048 = vrot.lane.b32.xlu0 %v1045, 64
    %v1049 = vpop.permute.xlu0 %1048
    %v1051 = vmul.f32 %v1044, %v1049
    %1053 = vrot.lane.b32.xlu0 %v1051, 32
    %v1054 = vpop.permute.xlu0 %1053
    %v1056 = vadd.f32 %v1046, %v1054
    %v1057 = vtanh.pop %v1056
    %1059 = vrot.lane.b32.xlu0 %v1057, 64
    %v1060 = vpop.permute.xlu0 %1059
    %v1062 = vmul.f32 %v1044, %v1060
    %v1063 = vpack.c.bf16 %v1062, %v1062
    %1065 = vrot.lane.b32.xlu0 %v1063, 32
    %v1066 = vpop.permute.xlu0 %1065
    %v1068 = vsel %vm185, %v1066, 0
    %1070 = vmatprep.subr.bf16.mxu0 0
    %1071 = vmatpush1.bf16.msra.mxu0 %v922
    %1072 = vmatprep.subr.bf16.mxu0 0
    %1073 = vmatpush1.bf16.msra.mxu0 %v923
    %1074 = vmatprep.subr.bf16.mxu0 0
    %1075 = vmatpush1.bf16.msra.mxu0 0
    %1076 = vmatprep.subr.bf16.mxu0 0
    %1077 = vmatpush1.bf16.msra.mxu0 0
    %1078 = vmatprep.subr.bf16.mxu0 0
    %1079 = vmatpush1.bf16.msra.mxu0 0
    %1080 = vmatprep.subr.bf16.mxu0 0
    %1081 = vmatpush1.bf16.msra.mxu0 0
    %1082 = vmatprep.subr.bf16.mxu0 0
    %1083 = vmatpush1.bf16.msra.mxu0 0
    %1084 = vmatprep.subr.bf16.mxu0 0
    %1085 = vmatpush1.bf16.msra.mxu0 0
    %1086 = vmatprep.subr.bf16.mxu0 0
    %1087 = vmatpush1.bf16.msra.mxu0 0
    %1088 = vmatprep.subr.bf16.mxu0 0
    %1089 = vmatpush1.bf16.msra.mxu0 0
    %1090 = vmatprep.subr.bf16.mxu0 0
    %1091 = vmatpush1.bf16.msra.mxu0 0
    %1092 = vmatprep.subr.bf16.mxu0 0
    %1093 = vmatpush1.bf16.msra.mxu0 0
    %1094 = vmatprep.subr.bf16.mxu0 0
    %1095 = vmatpush1.bf16.msra.mxu0 0
    %1096 = vmatprep.subr.bf16.mxu0 0
    %1097 = vmatpush1.bf16.msra.mxu0 0
    %1098 = vmatprep.subr.bf16.mxu0 0
    %1099 = vmatpush1.bf16.msra.mxu0 0
    %1100 = vmatprep.subr.bf16.mxu0 0
    %1101 = vmatpush1.bf16.msra.mxu0 0
    %1102 = vmatprep.mubr.bf16.mxu0 0
    %1103 = vmatmul.mubr.bf16.gmra.mrb[0].mxu0 %v1068
    %v1104 = vpop.f32.mrb[0].mxu0
    %v1105 = vadd.f32 0.0, %v1104
    %v1106 = vpop.f32.mrb[0].mxu0
    %v1107 = vpop.f32.mrb[0].mxu0
    %v1108 = vpop.f32.mrb[0].mxu0
    %1109 = vdwg.mxu0
    %v1110 = vadd.f32 %v892, %v1105
    %v1111 = vxor.u32 %v1110, 2147483648
    %v1112 = vmul.f32 %v1111, 1.442695
    %v1113 = vpow.pop %v1112
    %v1114 = vadd.f32 %v1113, 1.0
    %v1115 = vrcp.pop %v1114
    %v1116 = vmul.f32 1.0, %v1115
    %v1117 = vtanh.pop %v1110
    %v1118 = vmul.f32 %v1116, %v1056
    %1120 = vrot.lane.b32.xlu0 %v1117, 64
    %v1121 = vpop.permute.xlu0 %1120
    %v1123 = vmul.f32 %v1116, %v1121
    %1125 = vrot.lane.b32.xlu0 %v1123, 32
    %v1126 = vpop.permute.xlu0 %1125
    %v1128 = vadd.f32 %v1118, %v1126
    %v1129 = vtanh.pop %v1128
    %1131 = vrot.lane.b32.xlu0 %v1129, 64
    %v1132 = vpop.permute.xlu0 %1131
    %v1134 = vmul.f32 %v1116, %v1132
    %v1135 = vpack.c.bf16 %v1134, %v1134
    %1137 = vrot.lane.b32.xlu0 %v1135, 32
    %v1138 = vpop.permute.xlu0 %1137
    %v1140 = vsel %vm185, %v1138, 0
    %1142 = vmatprep.subr.bf16.mxu0 0
    %1143 = vmatpush1.bf16.msra.mxu0 %v922
    %1144 = vmatprep.subr.bf16.mxu0 0
    %1145 = vmatpush1.bf16.msra.mxu0 %v923
    %1146 = vmatprep.subr.bf16.mxu0 0
    %1147 = vmatpush1.bf16.msra.mxu0 0
    %1148 = vmatprep.subr.bf16.mxu0 0
    %1149 = vmatpush1.bf16.msra.mxu0 0
    %1150 = vmatprep.subr.bf16.mxu0 0
    %1151 = vmatpush1.bf16.msra.mxu0 0
    %1152 = vmatprep.subr.bf16.mxu0 0
    %1153 = vmatpush1.bf16.msra.mxu0 0
    %1154 = vmatprep.subr.bf16.mxu0 0
    %1155 = vmatpush1.bf16.msra.mxu0 0
    %1156 = vmatprep.subr.bf16.mxu0 0
    %1157 = vmatpush1.bf16.msra.mxu0 0
    %1158 = vmatprep.subr.bf16.mxu0 0
    %1159 = vmatpush1.bf16.msra.mxu0 0
    %1160 = vmatprep.subr.bf16.mxu0 0
    %1161 = vmatpush1.bf16.msra.mxu0 0
    %1162 = vmatprep.subr.bf16.mxu0 0
    %1163 = vmatpush1.bf16.msra.mxu0 0
    %1164 = vmatprep.subr.bf16.mxu0 0
    %1165 = vmatpush1.bf16.msra.mxu0 0
    %1166 = vmatprep.subr.bf16.mxu0 0
    %1167 = vmatpush1.bf16.msra.mxu0 0
    %1168 = vmatprep.subr.bf16.mxu0 0
    %1169 = vmatpush1.bf16.msra.mxu0 0
    %1170 = vmatprep.subr.bf16.mxu0 0
    %1171 = vmatpush1.bf16.msra.mxu0 0
    %1172 = vmatprep.subr.bf16.mxu0 0
    %1173 = vmatpush1.bf16.msra.mxu0 0
    %1174 = vmatprep.mubr.bf16.mxu0 0
    %1175 = vmatmul.mubr.bf16.gmra.mrb[0].mxu0 %v1140
    %v1176 = vpop.f32.mrb[0].mxu0
    %v1177 = vadd.f32 0.0, %v1176
    %v1178 = vpop.f32.mrb[0].mxu0
    %v1179 = vpop.f32.mrb[0].mxu0
    %v1180 = vpop.f32.mrb[0].mxu0
    %1181 = vdwg.mxu0
    %v1182 = vadd.f32 %v895, %v1177
    %v1183 = vxor.u32 %v1182, 2147483648
    %v1184 = vmul.f32 %v1183, 1.442695
    %v1185 = vpow.pop %v1184
    %v1186 = vadd.f32 %v1185, 1.0
    %v1187 = vrcp.pop %v1186
    %v1188 = vmul.f32 1.0, %v1187
    %v1189 = vtanh.pop %v1182
    %v1190 = vmul.f32 %v1188, %v1128
    %1192 = vrot.lane.b32.xlu0 %v1189, 64
    %v1193 = vpop.permute.xlu0 %1192
    %v1195 = vmul.f32 %v1188, %v1193
    %1197 = vrot.lane.b32.xlu0 %v1195, 32
    %v1198 = vpop.permute.xlu0 %1197
    %v1200 = vadd.f32 %v1190, %v1198
    %v1201 = vtanh.pop %v1200
    %1203 = vrot.lane.b32.xlu0 %v1201, 64
    %v1204 = vpop.permute.xlu0 %1203
    %v1206 = vmul.f32 %v1188, %v1204
    %v1207 = vpack.c.bf16 %v1206, %v1206
    %1209 = vrot.lane.b32.xlu0 %v1207, 32
    %v1210 = vpop.permute.xlu0 %1209
    %v1212 = vsel %vm185, %v1210, 0
    %1214 = vmatprep.subr.bf16.mxu0 0
    %1215 = vmatpush1.bf16.msra.mxu0 %v922
    %1216 = vmatprep.subr.bf16.mxu0 0
    %1217 = vmatpush1.bf16.msra.mxu0 %v923
    %1218 = vmatprep.subr.bf16.mxu0 0
    %1219 = vmatpush1.bf16.msra.mxu0 0
    %1220 = vmatprep.subr.bf16.mxu0 0
    %1221 = vmatpush1.bf16.msra.mxu0 0
    %1222 = vmatprep.subr.bf16.mxu0 0
    %1223 = vmatpush1.bf16.msra.mxu0 0
    %1224 = vmatprep.subr.bf16.mxu0 0
    %1225 = vmatpush1.bf16.msra.mxu0 0
    %1226 = vmatprep.subr.bf16.mxu0 0
    %1227 = vmatpush1.bf16.msra.mxu0 0
    %1228 = vmatprep.subr.bf16.mxu0 0
    %1229 = vmatpush1.bf16.msra.mxu0 0
    %1230 = vmatprep.subr.bf16.mxu0 0
    %1231 = vmatpush1.bf16.msra.mxu0 0
    %1232 = vmatprep.subr.bf16.mxu0 0
    %1233 = vmatpush1.bf16.msra.mxu0 0
    %1234 = vmatprep.subr.bf16.mxu0 0
    %1235 = vmatpush1.bf16.msra.mxu0 0
    %1236 = vmatprep.subr.bf16.mxu0 0
    %1237 = vmatpush1.bf16.msra.mxu0 0
    %1238 = vmatprep.subr.bf16.mxu0 0
    %1239 = vmatpush1.bf16.msra.mxu0 0
    %1240 = vmatprep.subr.bf16.mxu0 0
    %1241 = vmatpush1.bf16.msra.mxu0 0
    %1242 = vmatprep.subr.bf16.mxu0 0
    %1243 = vmatpush1.bf16.msra.mxu0 0
    %1244 = vmatprep.subr.bf16.mxu0 0
    %1245 = vmatpush1.bf16.msra.mxu0 0
    %1246 = vmatprep.mubr.bf16.mxu0 0
    %1247 = vmatmul.mubr.bf16.gmra.mrb[0].mxu0 %v1212
    %v1248 = vpop.f32.mrb[0].mxu0
    %v1249 = vadd.f32 0.0, %v1248
    %v1250 = vpop.f32.mrb[0].mxu0
    %v1251 = vpop.f32.mrb[0].mxu0
    %v1252 = vpop.f32.mrb[0].mxu0
    %1253 = vdwg.mxu0
    %v1254 = vadd.f32 %v900, %v1249
    %v1255 = vxor.u32 %v1254, 2147483648
    %v1256 = vmul.f32 %v1255, 1.442695
    %v1257 = vpow.pop %v1256
    %v1258 = vadd.f32 %v1257, 1.0
    %v1259 = vrcp.pop %v1258
    %v1260 = vmul.f32 1.0, %v1259
    %v1261 = vtanh.pop %v1254
    %v1262 = vmul.f32 %v1260, %v1200
    %1264 = vrot.lane.b32.xlu0 %v1261, 64
    %v1265 = vpop.permute.xlu0 %1264
    %v1267 = vmul.f32 %v1260, %v1265
    %1269 = vrot.lane.b32.xlu0 %v1267, 32
    %v1270 = vpop.permute.xlu0 %1269
    %v1272 = vadd.f32 %v1262, %v1270
    %v1273 = vtanh.pop %v1272
    %1275 = vrot.lane.b32.xlu0 %v1273, 64
    %v1276 = vpop.permute.xlu0 %1275
    %v1278 = vmul.f32 %v1260, %v1276
    %v1279 = vpack.c.bf16 %v1278, %v1278
    %1281 = vrot.lane.b32.xlu0 %v1279, 32
    %v1282 = vpop.permute.xlu0 %1281
    %v1284 = vsel %vm185, %v1282, 0
    %1286 = vmatprep.subr.bf16.mxu0 0
    %1287 = vmatpush1.bf16.msra.mxu0 %v922
    %1288 = vmatprep.subr.bf16.mxu0 0
    %1289 = vmatpush1.bf16.msra.mxu0 %v923
    %1290 = vmatprep.subr.bf16.mxu0 0
    %1291 = vmatpush1.bf16.msra.mxu0 0
    %1292 = vmatprep.subr.bf16.mxu0 0
    %1293 = vmatpush1.bf16.msra.mxu0 0
    %1294 = vmatprep.subr.bf16.mxu0 0
    %1295 = vmatpush1.bf16.msra.mxu0 0
    %1296 = vmatprep.subr.bf16.mxu0 0
    %1297 = vmatpush1.bf16.msra.mxu0 0
    %1298 = vmatprep.subr.bf16.mxu0 0
    %1299 = vmatpush1.bf16.msra.mxu0 0
    %1300 = vmatprep.subr.bf16.mxu0 0
    %1301 = vmatpush1.bf16.msra.mxu0 0
    %1302 = vmatprep.subr.bf16.mxu0 0
    %1303 = vmatpush1.bf16.msra.mxu0 0
    %1304 = vmatprep.subr.bf16.mxu0 0
    %1305 = vmatpush1.bf16.msra.mxu0 0
    %1306 = vmatprep.subr.bf16.mxu0 0
    %1307 = vmatpush1.bf16.msra.mxu0 0
    %1308 = vmatprep.subr.bf16.mxu0 0
    %1309 = vmatpush1.bf16.msra.mxu0 0
    %1310 = vmatprep.subr.bf16.mxu0 0
    %1311 = vmatpush1.bf16.msra.mxu0 0
    %1312 = vmatprep.subr.bf16.mxu0 0
    %1313 = vmatpush1.bf16.msra.mxu0 0
    %1314 = vmatprep.subr.bf16.mxu0 0
    %1315 = vmatpush1.bf16.msra.mxu0 0
    %1316 = vmatprep.subr.bf16.mxu0 0
    %1317 = vmatpush1.bf16.msra.mxu0 0
    %1318 = vmatprep.mubr.bf16.mxu0 0
    %1319 = vmatmul.mubr.bf16.gmra.mrb[0].mxu0 %v1284
    %v1320 = vpop.f32.mrb[0].mxu0
    %v1321 = vadd.f32 0.0, %v1320
    %v1322 = vpop.f32.mrb[0].mxu0
    %v1323 = vpop.f32.mrb[0].mxu0
    %v1324 = vpop.f32.mrb[0].mxu0
    %1325 = vdwg.mxu0
    %v1326 = vadd.f32 %v903, %v1321
    %v1327 = vxor.u32 %v1326, 2147483648
    %v1328 = vmul.f32 %v1327, 1.442695
    %v1329 = vpow.pop %v1328
    %v1330 = vadd.f32 %v1329, 1.0
    %v1331 = vrcp.pop %v1330
    %v1332 = vmul.f32 1.0, %v1331
    %v1333 = vtanh.pop %v1326
    %v1334 = vmul.f32 %v1332, %v1272
    %1336 = vrot.lane.b32.xlu0 %v1333, 64
    %v1337 = vpop.permute.xlu0 %1336
    %v1339 = vmul.f32 %v1332, %v1337
    %1341 = vrot.lane.b32.xlu0 %v1339, 32
    %v1342 = vpop.permute.xlu0 %1341
    %v1344 = vadd.f32 %v1334, %v1342
    %v1345 = vtanh.pop %v1344
    %1347 = vrot.lane.b32.xlu0 %v1345, 64
    %v1348 = vpop.permute.xlu0 %1347
    %v1350 = vmul.f32 %v1332, %v1348
    %v1351 = vpack.c.bf16 %v1350, %v1350
    %1353 = vrot.lane.b32.xlu0 %v1351, 32
    %v1354 = vpop.permute.xlu0 %1353
    %v1356 = vsel %vm185, %v1354, 0
    %1358 = vmatprep.subr.bf16.mxu0 0
    %1359 = vmatpush1.bf16.msra.mxu0 %v922
    %1360 = vmatprep.subr.bf16.mxu0 0
    %1361 = vmatpush1.bf16.msra.mxu0 %v923
    %1362 = vmatprep.subr.bf16.mxu0 0
    %1363 = vmatpush1.bf16.msra.mxu0 0
    %1364 = vmatprep.subr.bf16.mxu0 0
    %1365 = vmatpush1.bf16.msra.mxu0 0
    %1366 = vmatprep.subr.bf16.mxu0 0
    %1367 = vmatpush1.bf16.msra.mxu0 0
    %1368 = vmatprep.subr.bf16.mxu0 0
    %1369 = vmatpush1.bf16.msra.mxu0 0
    %1370 = vmatprep.subr.bf16.mxu0 0
    %1371 = vmatpush1.bf16.msra.mxu0 0
    %1372 = vmatprep.subr.bf16.mxu0 0
    %1373 = vmatpush1.bf16.msra.mxu0 0
    %1374 = vmatprep.subr.bf16.mxu0 0
    %1375 = vmatpush1.bf16.msra.mxu0 0
    %1376 = vmatprep.subr.bf16.mxu0 0
    %1377 = vmatpush1.bf16.msra.mxu0 0
    %1378 = vmatprep.subr.bf16.mxu0 0
    %1379 = vmatpush1.bf16.msra.mxu0 0
    %1380 = vmatprep.subr.bf16.mxu0 0
    %1381 = vmatpush1.bf16.msra.mxu0 0
    %1382 = vmatprep.subr.bf16.mxu0 0
    %1383 = vmatpush1.bf16.msra.mxu0 0
    %1384 = vmatprep.subr.bf16.mxu0 0
    %1385 = vmatpush1.bf16.msra.mxu0 0
    %1386 = vmatprep.subr.bf16.mxu0 0
    %1387 = vmatpush1.bf16.msra.mxu0 0
    %1388 = vmatprep.subr.bf16.mxu0 0
    %1389 = vmatpush1.bf16.msra.mxu0 0
    %1390 = vmatprep.mubr.bf16.mxu0 0
    %1391 = vmatmul.mubr.bf16.gmra.mrb[0].mxu0 %v1356
    %v1392 = vpop.f32.mrb[0].mxu0
    %v1393 = vadd.f32 0.0, %v1392
    %v1394 = vpop.f32.mrb[0].mxu0
    %v1395 = vpop.f32.mrb[0].mxu0
    %v1396 = vpop.f32.mrb[0].mxu0
    %1397 = vdwg.mxu0
    %v1398 = vadd.f32 %v908, %v1393
    %v1399 = vxor.u32 %v1398, 2147483648
    %v1400 = vmul.f32 %v1399, 1.442695
    %v1401 = vpow.pop %v1400
    %v1402 = vadd.f32 %v1401, 1.0
    %v1403 = vrcp.pop %v1402
    %v1404 = vmul.f32 1.0, %v1403
    %v1405 = vtanh.pop %v1398
    %v1406 = vmul.f32 %v1404, %v1344
    %1408 = vrot.lane.b32.xlu0 %v1405, 64
    %v1409 = vpop.permute.xlu0 %1408
    %v1411 = vmul.f32 %v1404, %v1409
    %1413 = vrot.lane.b32.xlu0 %v1411, 32
    %v1414 = vpop.permute.xlu0 %1413
    %v1416 = vadd.f32 %v1406, %v1414
    %v1417 = vtanh.pop %v1416
    %1419 = vrot.lane.b32.xlu0 %v1417, 64
    %v1420 = vpop.permute.xlu0 %1419
    %v1422 = vmul.f32 %v1404, %v1420
    %v1423 = vpack.c.bf16 %v1422, %v1422
    %1425 = vrot.lane.b32.xlu0 %v1423, 32
    %v1426 = vpop.permute.xlu0 %1425
    %v1428 = vsel %vm185, %v1426, 0
    %1430 = vmatprep.subr.bf16.mxu0 0
    %1431 = vmatpush1.bf16.msra.mxu0 %v922
    %1432 = vmatprep.subr.bf16.mxu0 0
    %1433 = vmatpush1.bf16.msra.mxu0 %v923
    %1434 = vmatprep.subr.bf16.mxu0 0
    %1435 = vmatpush1.bf16.msra.mxu0 0
    %1436 = vmatprep.subr.bf16.mxu0 0
    %1437 = vmatpush1.bf16.msra.mxu0 0
    %1438 = vmatprep.subr.bf16.mxu0 0
    %1439 = vmatpush1.bf16.msra.mxu0 0
    %1440 = vmatprep.subr.bf16.mxu0 0
    %1441 = vmatpush1.bf16.msra.mxu0 0
    %1442 = vmatprep.subr.bf16.mxu0 0
    %1443 = vmatpush1.bf16.msra.mxu0 0
    %1444 = vmatprep.subr.bf16.mxu0 0
    %1445 = vmatpush1.bf16.msra.mxu0 0
    %1446 = vmatprep.subr.bf16.mxu0 0
    %1447 = vmatpush1.bf16.msra.mxu0 0
    %1448 = vmatprep.subr.bf16.mxu0 0
    %1449 = vmatpush1.bf16.msra.mxu0 0
    %1450 = vmatprep.subr.bf16.mxu0 0
    %1451 = vmatpush1.bf16.msra.mxu0 0
    %1452 = vmatprep.subr.bf16.mxu0 0
    %1453 = vmatpush1.bf16.msra.mxu0 0
    %1454 = vmatprep.subr.bf16.mxu0 0
    %1455 = vmatpush1.bf16.msra.mxu0 0
    %1456 = vmatprep.subr.bf16.mxu0 0
    %1457 = vmatpush1.bf16.msra.mxu0 0
    %1458 = vmatprep.subr.bf16.mxu0 0
    %1459 = vmatpush1.bf16.msra.mxu0 0
    %1460 = vmatprep.subr.bf16.mxu0 0
    %1461 = vmatpush1.bf16.msra.mxu0 0
    %1462 = vmatprep.mubr.bf16.mxu0 0
    %1463 = vmatmul.mubr.bf16.gmra.mrb[0].mxu0 %v1428
    %v1464 = vpop.f32.mrb[0].mxu0
    %v1465 = vadd.f32 0.0, %v1464
    %v1466 = vpop.f32.mrb[0].mxu0
    %v1467 = vpop.f32.mrb[0].mxu0
    %v1468 = vpop.f32.mrb[0].mxu0
    %1469 = vdwg.mxu0
    %v1470 = vadd.f32 %v911, %v1465
    %v1471 = vxor.u32 %v1470, 2147483648
    %v1472 = vmul.f32 %v1471, 1.442695
    %v1473 = vpow.pop %v1472
    %v1474 = vadd.f32 %v1473, 1.0
    %v1475 = vrcp.pop %v1474
    %v1476 = vmul.f32 1.0, %v1475
    %v1477 = vtanh.pop %v1470
    %v1478 = vmul.f32 %v1476, %v1416
    %1480 = vrot.lane.b32.xlu0 %v1477, 64
    %v1481 = vpop.permute.xlu0 %1480
    %v1483 = vmul.f32 %v1476, %v1481
    %1485 = vrot.lane.b32.xlu0 %v1483, 32
    %v1486 = vpop.permute.xlu0 %1485
    %v1488 = vadd.f32 %v1478, %v1486
    %v1489 = vtanh.pop %v1488
    %1491 = vrot.lane.b32.xlu0 %v1489, 64
    %v1492 = vpop.permute.xlu0 %1491
    %v1494 = vmul.f32 %v1476, %v1492
    %v1495 = vpack.c.bf16 %v1494, %v1494
    %v1496 = vld [vmem:[%s7] sm:$0xf]
    %v1497 = vld [vmem:[%s7 + $0x4] sm:$0xf]
    %v1498 = vld [vmem:[%s7 + $0x8] sm:$0xf]
    %v1499 = vld [vmem:[%s7 + $0xc] sm:$0xf]
    %v1500 = vld [vmem:[%s8] sm:$0x1]
    %v1502 = vlaneseq
    %v1503 = vshrl.u32 %v1502, 7
    %v1504 = vsub.s32 0, %v1503
    %v1505 = vrot.slane %v1500, %v1504
    %1508 = vrot.lane.b32.xlu0 %v1495, 32
    %v1509 = vpop.permute.xlu0 %1508
    %v1514 = vunpack.c.l.b16 %v1496
    %v1515 = vunpack.c.l.b16 %v1497
    %v1516 = vunpack.c.l.b16 %v1498
    %v1517 = vunpack.c.l.b16 %v1499
    %v1518 = vpack.c.b16 %v1515, %v1514
    %v1519 = vpack.c.b16 %v1517, %v1516
    %v1523 = vsel %vm185, %v1509, 0
    %1525 = vmatprep.subr.bf16.mxu0 0
    %1526 = vmatpush1.bf16.msra.mxu0 %v1518
    %1527 = vmatprep.subr.bf16.mxu0 0
    %1528 = vmatpush1.bf16.msra.mxu0 %v1519
    %1529 = vmatprep.subr.bf16.mxu0 0
    %1530 = vmatpush1.bf16.msra.mxu0 0
    %1531 = vmatprep.subr.bf16.mxu0 0
    %1532 = vmatpush1.bf16.msra.mxu0 0
    %1533 = vmatprep.subr.bf16.mxu0 0
    %1534 = vmatpush1.bf16.msra.mxu0 0
    %1535 = vmatprep.subr.bf16.mxu0 0
    %1536 = vmatpush1.bf16.msra.mxu0 0
    %1537 = vmatprep.subr.bf16.mxu0 0
    %1538 = vmatpush1.bf16.msra.mxu0 0
    %1539 = vmatprep.subr.bf16.mxu0 0
    %1540 = vmatpush1.bf16.msra.mxu0 0
    %1541 = vmatprep.subr.bf16.mxu0 0
    %1542 = vmatpush1.bf16.msra.mxu0 0
    %1543 = vmatprep.subr.bf16.mxu0 0
    %1544 = vmatpush1.bf16.msra.mxu0 0
    %1545 = vmatprep.subr.bf16.mxu0 0
    %1546 = vmatpush1.bf16.msra.mxu0 0
    %1547 = vmatprep.subr.bf16.mxu0 0
    %1548 = vmatpush1.bf16.msra.mxu0 0
    %1549 = vmatprep.subr.bf16.mxu0 0
    %1550 = vmatpush1.bf16.msra.mxu0 0
    %1551 = vmatprep.subr.bf16.mxu0 0
    %1552 = vmatpush1.bf16.msra.mxu0 0
    %1553 = vmatprep.subr.bf16.mxu0 0
    %1554 = vmatpush1.bf16.msra.mxu0 0
    %1555 = vmatprep.subr.bf16.mxu0 0
    %1556 = vmatpush1.bf16.msra.mxu0 0
    %1557 = vmatprep.mubr.bf16.mxu0 0
    %1558 = vmatmul.mubr.bf16.gmra.mrb[0].mxu0 %v1523
    %v1559 = vpop.f32.mrb[0].mxu0
    %v1560 = vadd.f32 %v1505, %v1559
    %v1561 = vpop.f32.mrb[0].mxu0
    %v1562 = vpop.f32.mrb[0].mxu0
    %v1563 = vpop.f32.mrb[0].mxu0
    %1564 = vdwg.mxu0
    %v1565 = vxor.u32 %v1560, 2147483648
    %v1566 = vmul.f32 %v1565, 1.442695
    %v1567 = vpow.pop %v1566
    %v1568 = vadd.f32 %v1567, 1.0
    %v1569 = vrcp.pop %v1568
    %v1570 = vmul.f32 1.0, %v1569
    %1571 = vst [vmem:[#allocation6] sm:$0xff] %v1570
    // Predicated region
    $region42: #{tpu_custom_call.1} parent=1 // pred_check
      _
    $region43: #{tpu_custom_call.1} parent=1 // pred_check_branch
      %1573 = sbr.rel (0) target = $region45
    $region44: #{tpu_custom_call.1} parent=1 // pred_region
      %s1575 = ssub.s32 128, 128
      %1576 = vsyncadd [#allocation5], %s1575
      %s1578 = sshll.u32 [#allocation6], 4
      %s1579 = int_to_ptr.vmem [resolvable:$true] %s1578
      %1581 = dma.vmem_to_hbm [thread:$0]  %s1579, 128, %s9, [#allocation5]
    $region45: #{tpu_custom_call.1} parent=1 // pred_fallthru
      _
    // Predicated region
    $region46: #{tpu_custom_call.1} parent=1 // pred_check
      _
    $region47: #{tpu_custom_call.1} parent=1 // pred_check_branch
      %1583 = sbr.rel (0) target = $region49
    $region48: #{tpu_custom_call.1} parent=1 // pred_region
      %1584 = dma.done [#allocation5], 128
    $region49: #{tpu_custom_call.1} parent=1 // pred_fallthru
      _
    %1585 = vsyncpa [#allocation4], 1
    %1586 = vsyncpa [#allocation5], 1

</llo_original>
